<compile_context>
chip_gen: v5e
topology: v5e:2x2
jax: 0.10.0
libtpu: 0.0.40
codegen_flags: <defaults>
</compile_context>

<pallas_src>
import math
import functools

import jax
import jax.numpy as jnp
import numpy as np
from jax import lax
from jax.experimental import pallas as pl
from jax.experimental.pallas import tpu as pltpu

_VMEM_LIMIT = 32 * 1024 * 1024  # explicit scoped-VMEM budget (safe on v5e/v6e/v7x)
_APPROX_RECIP = True            # set False for exact softmax reciprocal (training parity)


def _sublane_align(dtype):
    """Sublane alignment for the second-to-last block dim, by element size."""
    return {4: 8, 2: 16, 1: 32}[jnp.dtype(dtype).itemsize]


def _pick_tile(dim, preferred, align):
    """Largest `align`-multiple <= preferred that divides dim, else full dim.

    TODO(synk): non-divisible dims fall back to a full-dim block; switch to
    pl.cdiv grids with masked boundary tiles for odd shapes so the fallback
    cannot blow the VMEM budget on large prime-ish axes.
    """
    if dim <= preferred:
        return dim
    t = (preferred // align) * align
    while t >= align:
        if dim % t == 0:
            return t
        t -= align
    return dim


# ----------------------------------------------------------------------------
# Kernel 1: tiled dense projection  y = x @ w     (x: (M, K), w: (K, N))
# ----------------------------------------------------------------------------
def _matmul_kernel(x_ref, w_ref, o_ref, acc_ref):
    @pl.when(pl.program_id(2) == 0)
    def _():
        acc_ref[...] = jnp.zeros_like(acc_ref)

    acc_ref[...] += jnp.dot(
        x_ref[...], w_ref[...], preferred_element_type=jnp.float32
    )

    @pl.when(pl.program_id(2) == pl.num_programs(2) - 1)
    def _():
        o_ref[...] = acc_ref[...].astype(o_ref.dtype)


def linear(x, w, *, tm=512, tn=512, tk=512):
    m, k = x.shape
    k2, n = w.shape
    assert k == k2
    tm = _pick_tile(m, tm, _sublane_align(x.dtype))
    tn = _pick_tile(n, tn, 128)
    tk = _pick_tile(k, tk, 128)
    grid = (m // tm, n // tn, k // tk)
    return pl.pallas_call(
        _matmul_kernel,
        out_shape=jax.ShapeDtypeStruct((m, n), x.dtype),
        grid_spec=pltpu.PrefetchScalarGridSpec(
            num_scalar_prefetch=0,
            grid=grid,
            in_specs=[
                pl.BlockSpec((tm, tk), lambda i, j, kk: (i, kk)),
                pl.BlockSpec((tk, tn), lambda i, j, kk: (kk, j)),
            ],
            out_specs=pl.BlockSpec((tm, tn), lambda i, j, kk: (i, j)),
            scratch_shapes=[pltpu.VMEM((tm, tn), jnp.float32)],
        ),
        compiler_params=pltpu.CompilerParams(
            dimension_semantics=("parallel", "parallel", "arbitrary"),
            vmem_limit_bytes=_VMEM_LIMIT,
        ),
    )(x, w)


# ----------------------------------------------------------------------------
# Kernel 2: flash-style multi-head scaled dot-product attention with masked
# softmax.  Grid = (batch, Lq-tile, Lk-tile).  All heads of one (batch, q-tile)
# are processed per grid step; the KV axis is the innermost "arbitrary" axis
# with online-softmax accumulators (m, l per head; acc lane-dense over H) in
# VMEM scratch.  q/k/v blocks and the output keep the (.., L, H) layout.
# NOTE: per-head QK^T contracts over head_dim (often 64) which underfills the
# 256-wide MXU on v6e/v7x — keep tq and tkv >= 256 and prefer head_dim
# multiples of 128 when choosing model shapes.
# ----------------------------------------------------------------------------
def _attn_kernel(*refs, num_heads, hh, has_mask, approx_recip):
    if has_mask:
        q_ref, k_ref, v_ref, msk_ref, o_ref, m_sc, l_sc, acc_sc = refs
    else:
        q_ref, k_ref, v_ref, o_ref, m_sc, l_sc, acc_sc = refs

    ki = pl.program_id(2)

    @pl.when(ki == 0)
    def _():
        m_sc[...] = jnp.full(m_sc.shape, -jnp.inf, m_sc.dtype)
        l_sc[...] = jnp.zeros(l_sc.shape, l_sc.dtype)
        acc_sc[...] = jnp.zeros(acc_sc.shape, acc_sc.dtype)

    if has_mask:
        valid = msk_ref[0] > 0.5          # (1, tkv) bool, broadcast over queries

    for head in range(num_heads):         # static unroll, Ref-slice per head
        lo = head * hh
        # No f32 upcast: feed the input dtype to the MXU, accumulate in f32.
        # 1/sqrt(head_dim) is already folded into W_q (see make_mha_params).
        qh = q_ref[0, :, lo:lo + hh]       # (tq, hh)
        kh = k_ref[0, :, lo:lo + hh]       # (tkv, hh)
        s = lax.dot_general(
            qh, kh, (((1,), (1,)), ((), ())),
            preferred_element_type=jnp.float32,
        )                                  # (tq, tkv)
        if has_mask:
            # sequence_mask semantics: masked positions are SET to -1e6
            s = jnp.where(valid, s, -1000000.0)

        m_prev = m_sc[:, head:head + 1]                    # (tq, 1)
        m_new = jnp.maximum(m_prev, jnp.max(s, axis=-1, keepdims=True))
        alpha = jnp.exp(m_prev - m_new)
        p = jnp.exp(s - m_new)                             # (tq, tkv) f32
        l_sc[:, head:head + 1] = (alpha * l_sc[:, head:head + 1]
                                  + jnp.sum(p, axis=-1, keepdims=True))
        vh = v_ref[0, :, lo:lo + hh]                        # (tkv, hh)
        pv = lax.dot_general(
            p.astype(vh.dtype), vh, (((1,), (0,)), ((), ())),
            preferred_element_type=jnp.float32,
        )                                                   # (tq, hh)
        acc_sc[:, lo:lo + hh] = alpha * acc_sc[:, lo:lo + hh] + pv
        m_sc[:, head:head + 1] = m_new

    @pl.when(ki == pl.num_programs(2) - 1)
    def _():
        for head in range(num_heads):
            lo = head * hh
            denom = l_sc[:, head:head + 1]
            if approx_recip:
                inv_l = pl.reciprocal(denom, approx=True)
            else:
                inv_l = 1.0 / denom
            # direct per-head store into the lane-dense (tq, H) output block
            o_ref[0, :, lo:lo + hh] = (acc_sc[:, lo:lo + hh]
                                       * inv_l).astype(o_ref.dtype)


def _attention(q_arr, k_arr, v_arr, mask, *, num_heads, h,
               q_off=0, k_off=0, v_off=0):
    """q_arr/k_arr/v_arr are (B, L, *) buffers; {q,k,v}_off select the H-wide
    column block (0 for standalone arrays; 0/1/2 for a fused (B,L,3H) buffer,
    0/1 for a fused (B,L,2H) KV buffer)."""
    b, lq = q_arr.shape[0], q_arr.shape[1]
    lk = k_arr.shape[1]
    assert h % num_heads == 0
    hh = h // num_heads
    dtype = q_arr.dtype

    tq = _pick_tile(lq, 256, _sublane_align(dtype))
    # kv tile: 128-lane aligned (also satisfies the mask's lane constraint),
    # kept large (>=256 when possible) to fill the MXU contraction.
    tkv = _pick_tile(lk, 512, 128)
    grid = (b, lq // tq, lk // tkv)

    in_specs = [
        pl.BlockSpec((1, tq, h), lambda bi, qi, ki, o=q_off: (bi, qi, o)),
        pl.BlockSpec((1, tkv, h), lambda bi, qi, ki, o=k_off: (bi, ki, o)),
        pl.BlockSpec((1, tkv, h), lambda bi, qi, ki, o=v_off: (bi, ki, o)),
    ]
    args = [q_arr, k_arr, v_arr]
    has_mask = mask is not None
    if has_mask:
        m = mask.astype(jnp.float32).reshape(b, 1, lk)
        in_specs.append(pl.BlockSpec((1, 1, tkv), lambda bi, qi, ki: (bi, 0, ki)))
        args.append(m)

    kernel = functools.partial(
        _attn_kernel, num_heads=num_heads, hh=hh, has_mask=has_mask,
        approx_recip=_APPROX_RECIP,
    )
    return pl.pallas_call(
        kernel,
        out_shape=jax.ShapeDtypeStruct((b, lq, h), dtype),
        grid_spec=pltpu.PrefetchScalarGridSpec(
            num_scalar_prefetch=0,
            grid=grid,
            in_specs=in_specs,
            out_specs=pl.BlockSpec((1, tq, h), lambda bi, qi, ki: (bi, qi, 0)),
            scratch_shapes=[
                pltpu.VMEM((tq, num_heads), jnp.float32),   # running max m
                pltpu.VMEM((tq, num_heads), jnp.float32),   # running sum l
                pltpu.VMEM((tq, h), jnp.float32),           # output accumulator
            ],
        ),
        compiler_params=pltpu.CompilerParams(
            dimension_semantics=("parallel", "parallel", "arbitrary"),
            vmem_limit_bytes=_VMEM_LIMIT,
        ),
    )(*args)


# ----------------------------------------------------------------------------
# Parameter setup (done ONCE, outside the forward): fold 1/sqrt(head_dim) into
# W_q and pre-fuse the QKV / KV weight matrices.
# ----------------------------------------------------------------------------
def make_mha_params(w_q, w_k, w_v, w_o, num_heads):
    h = w_q.shape[0]
    assert h % num_heads == 0
    hh = h // num_heads
    scale = 1.0 / math.sqrt(hh)
    w_q_s = (w_q.astype(jnp.float32) * scale).astype(w_q.dtype)
    return {
        "w_q": w_q_s,
        "w_k": w_k,
        "w_v": w_v,
        "w_o": w_o,
        "w_qkv": jnp.concatenate([w_q_s, w_k, w_v], axis=1),   # (H, 3H)
        "w_kv": jnp.concatenate([w_k, w_v], axis=1),           # (H, 2H)
    }


# ----------------------------------------------------------------------------
# MultiHeadAttention forward (no host-side head transposes).
# ----------------------------------------------------------------------------
@functools.partial(jax.jit, static_argnames=("num_heads",))
def _mha_self(x, attention_mask, w_qkv, w_o, *, num_heads):
    b, l, h = x.shape
    # fused Q/K/V projection: one tiled matmul, x read from HBM once
    qkv = linear(x.reshape(b * l, h), w_qkv).reshape(b, l, 3 * h)
    if h % 128 == 0:
        # feed the fused buffer straight into attention; q/k/v selected by
        # column-block offsets in the BlockSpec index maps (no split copies)
        out = _attention(qkv, qkv, qkv, attention_mask,
                         num_heads=num_heads, h=h, q_off=0, k_off=1, v_off=2)
    else:
        # small-H fallback: block last-dim must be 128-divisible or full
        out = _attention(qkv[:, :, :h], qkv[:, :, h:2 * h], qkv[:, :, 2 * h:],
                         attention_mask, num_heads=num_heads, h=h)
    return linear(out.reshape(b * l, h), w_o).reshape(b, l, h)


@functools.partial(jax.jit, static_argnames=("num_heads",))
def _mha_cross_kv(queries, keys, attention_mask, w_q, w_kv, w_o, *, num_heads):
    """Cross-attention where keys is values: fused (H, 2H) K/V projection."""
    b, lq, h = queries.shape
    lk = keys.shape[1]
    q = linear(queries.reshape(b * lq, h), w_q).reshape(b, lq, h)
    kv = linear(keys.reshape(b * lk, h), w_kv).reshape(b, lk, 2 * h)
    if h % 128 == 0:
        out = _attention(q, kv, kv, attention_mask,
                         num_heads=num_heads, h=h, k_off=0, v_off=1)
    else:
        out = _attention(q, kv[:, :, :h], kv[:, :, h:], attention_mask,
                         num_heads=num_heads, h=h)
    return linear(out.reshape(b * lq, h), w_o).reshape(b, lq, h)


@functools.partial(jax.jit, static_argnames=("num_heads",))
def _mha_cross_general(queries, keys, values, attention_mask,
                       w_q, w_k, w_v, w_o, *, num_heads):
    b, lq, h = queries.shape
    lk = keys.shape[1]
    q = linear(queries.reshape(b * lq, h), w_q).reshape(b, lq, h)
    k = linear(keys.reshape(b * lk, h), w_k).reshape(b, lk, h)
    v = linear(values.reshape(b * lk, h), w_v).reshape(b, lk, h)
    out = _attention(q, k, v, attention_mask, num_heads=num_heads, h=h)
    return linear(out.reshape(b * lq, h), w_o).reshape(b, lq, h)


def multi_head_attention(queries, keys, values, attention_mask, params, *,
                         num_heads):
    if queries is keys and keys is values:
        return _mha_self(queries, attention_mask, params["w_qkv"],
                         params["w_o"], num_heads=num_heads)
    if keys is values:
        return _mha_cross_kv(queries, keys, attention_mask, params["w_q"],
                             params["w_kv"], params["w_o"],
                             num_heads=num_heads)
    return _mha_cross_general(queries, keys, values, attention_mask,
                              params["w_q"], params["w_k"], params["w_v"],
                              params["w_o"], num_heads=num_heads)


# ----------------------------------------------------------------------------
# Pure-JAX reference for correctness check (computed in f32).
# ----------------------------------------------------------------------------
def mha_reference(queries, keys, values, attention_mask,
                  w_q, w_k, w_v, w_o, num_heads):
    f32 = jnp.float32
    queries, keys, values = (a.astype(f32) for a in (queries, keys, values))
    w_q, w_k, w_v, w_o = (w.astype(f32) for w in (w_q, w_k, w_v, w_o))
    b, lq, h = queries.shape
    lk = keys.shape[1]
    hh = h // num_heads
    q = (queries @ w_q).reshape(b, lq, num_heads, hh)
    k = (keys @ w_k).reshape(b, lk, num_heads, hh)
    v = (values @ w_v).reshape(b, lk, num_heads, hh)
    scores = jnp.einsum("bqhd,bkhd->bhqk", q, k) / math.sqrt(hh)
    if attention_mask is not None:
        m = attention_mask.astype(bool).reshape(b, 1, 1, lk)
        scores = jnp.where(m, scores, -1000000.0)
    p = jax.nn.softmax(scores, axis=-1)
    out = jnp.einsum("bhqk,bkhd->bqhd", p, v).reshape(b, lq, h)
    return out @ w_o


if __name__ == "__main__":
    root = jax.random.PRNGKey(0)

    def check(out, ref, tol):
        np.testing.assert_allclose(np.asarray(out, np.float32),
                                   np.asarray(ref, np.float32),
                                   rtol=tol, atol=tol)

    # (H, num_heads, dtype, tol): pl.reciprocal(approx=True) -> tol > 1e-5;
    # bf16 activations get a proportionally looser tolerance.
    cases = [(32, 4, jnp.float32, 2e-3),
             (128, 8, jnp.float32, 2e-3),
             (128, 8, jnp.bfloat16, 6e-2)]

    for (H, NUM_HEADS, DT, TOL) in cases:
        B, LQ, LK = 2, 8, 8
        k0, k1, k2, kp = jax.random.split(jax.random.fold_in(root, H), 4)
        x = jax.random.normal(k0, (B, LQ, H), jnp.float32).astype(DT)
        enc = jax.random.normal(k1, (B, LK, H), jnp.float32).astype(DT)
        enc2 = jax.random.normal(k2, (B, LK, H), jnp.float32).astype(DT)

        # Linear(H, H, bias=False) x4, stored (in, out)
        scale = 1.0 / math.sqrt(H)
        kwq, kwk, kwv, kwo = jax.random.split(kp, 4)
        w_q = jax.random.uniform(kwq, (H, H), jnp.float32, -scale, scale).astype(DT)
        w_k = jax.random.uniform(kwk, (H, H), jnp.float32, -scale, scale).astype(DT)
        w_v = jax.random.uniform(kwv, (H, H), jnp.float32, -scale, scale).astype(DT)
        w_o = jax.random.uniform(kwo, (H, H), jnp.float32, -scale, scale).astype(DT)

        # weight fusion + scale folding done ONCE here (outside the forward)
        params = make_mha_params(w_q, w_k, w_v, w_o, NUM_HEADS)

        # 2-D attention mask (B, Lk): valid key lengths [5, 8]
        valid_lens = jnp.array([5, 8], jnp.int32)
        attention_mask = (jnp.arange(LK)[None, :]
                          < valid_lens[:, None]).astype(jnp.float32)

        # 1) self-attention with mask (fused QKV projection)
        out = multi_head_attention(x, x, x, attention_mask, params,
                                   num_heads=NUM_HEADS)
        out = jax.block_until_ready(out)
        check(out, mha_reference(x, x, x, attention_mask,
                                 w_q, w_k, w_v, w_o, NUM_HEADS), TOL)

        # 2) cross-attention with mask, keys is values (fused KV projection)
        out = multi_head_attention(x, enc, enc, attention_mask, params,
                                   num_heads=NUM_HEADS)
        out = jax.block_until_ready(out)
        check(out, mha_reference(x, enc, enc, attention_mask,
                                 w_q, w_k, w_v, w_o, NUM_HEADS), TOL)

        # 3) mask=None self-attention path (plain softmax)
        out = multi_head_attention(x, x, x, None, params, num_heads=NUM_HEADS)
        out = jax.block_until_ready(out)
        check(out, mha_reference(x, x, x, None,
                                 w_q, w_k, w_v, w_o, NUM_HEADS), TOL)

        # 4) general cross-attention (keys != values) with mask
        out = multi_head_attention(x, enc, enc2, attention_mask, params,
                                   num_heads=NUM_HEADS)
        out = jax.block_until_ready(out)
        check(out, mha_reference(x, enc, enc2, attention_mask,
                                 w_q, w_k, w_v, w_o, NUM_HEADS), TOL)

    print("KERNEL_OK")
</pallas_src>

<mosaic_0001>
module attributes {stable_mosaic.version = 11 : i64} {
  func.func @_matmul_kernel(%arg0: i32, %arg1: i32, %arg2: i32, %arg3: memref<16x32xf32, #tpu.memory_space<vmem>>, %arg4: memref<32x96xf32, #tpu.memory_space<vmem>>, %arg5: memref<16x96xf32, #tpu.memory_space<vmem>>, %arg6: memref<16x96xf32, #tpu.memory_space<vmem>>) attributes {dimension_semantics = [#tpu.dimension_semantics<parallel>, #tpu.dimension_semantics<parallel>, #tpu.dimension_semantics<arbitrary>], iteration_bounds = array<i64: 1, 1, 1>, scalar_prefetch = 0 : i64, scratch_operands = 1 : i64, tpu.core_type = #tpu.core_type<tc>, window_params = [{transform_indices = @transform_0, window_bounds = array<i64: 16, 32>}, {transform_indices = @transform_1, window_bounds = array<i64: 32, 96>}, {transform_indices = @transform_2, window_bounds = array<i64: 16, 96>}]} {
    %c0_i32 = arith.constant 0 : i32
    %0 = arith.cmpi eq, %arg2, %c0_i32 : i32
    %1 = arith.extui %0 : i1 to i32
    %c0_i32_0 = arith.constant 0 : i32
    %2 = arith.cmpi ne, %1, %c0_i32_0 : i32
    scf.if %2 {
      %cst_10 = arith.constant 0.000000e+00 : f32
      %12 = vector.broadcast %cst_10 : f32 to vector<16x96xf32>
      %c0_11 = arith.constant 0 : index
      %c0_12 = arith.constant 0 : index
      %13 = vector.load %arg6[%c0_11, %c0_12] : memref<16x96xf32, #tpu.memory_space<vmem>>, vector<16x96xf32>
      tpu.vector_store %arg6[%c0_11, %c0_12], %12 {strides = array<i32>} : memref<16x96xf32, #tpu.memory_space<vmem>>, vector<16x96xf32>,
    } else {
    }
    %c0 = arith.constant 0 : index
    %c0_1 = arith.constant 0 : index
    %3 = vector.load %arg6[%c0, %c0_1] : memref<16x96xf32, #tpu.memory_space<vmem>>, vector<16x96xf32>
    %c0_2 = arith.constant 0 : index
    %c0_3 = arith.constant 0 : index
    %4 = vector.load %arg3[%c0_2, %c0_3] : memref<16x32xf32, #tpu.memory_space<vmem>>, vector<16x32xf32>
    %c0_4 = arith.constant 0 : index
    %c0_5 = arith.constant 0 : index
    %5 = vector.load %arg4[%c0_4, %c0_5] : memref<32x96xf32, #tpu.memory_space<vmem>>, vector<32x96xf32>
    %cst = arith.constant dense<0.000000e+00> : vector<16x96xf32>
    %6 = tpu.matmul %4, %5, %cst {dimension_numbers = #tpu.dot_dimension_numbers<[1], [0], [0], [1], [0, 0, 1, 1], [], []>} : vector<16x32xf32>, vector<32x96xf32>, vector<16x96xf32> -> vector<16x96xf32>
    %7 = arith.addf %3, %6 : vector<16x96xf32>
    %c0_6 = arith.constant 0 : index
    %c0_7 = arith.constant 0 : index
    %8 = vector.load %arg6[%c0_6, %c0_7] : memref<16x96xf32, #tpu.memory_space<vmem>>, vector<16x96xf32>
    tpu.vector_store %arg6[%c0_6, %c0_7], %7 {strides = array<i32>} : memref<16x96xf32, #tpu.memory_space<vmem>>, vector<16x96xf32>,
    %c0_i32_8 = arith.constant 0 : i32
    %9 = arith.cmpi eq, %arg2, %c0_i32_8 : i32
    %10 = arith.extui %9 : i1 to i32
    %c0_i32_9 = arith.constant 0 : i32
    %11 = arith.cmpi ne, %10, %c0_i32_9 : i32
    scf.if %11 {
      %c0_10 = arith.constant 0 : index
      %c0_11 = arith.constant 0 : index
      %12 = vector.load %arg6[%c0_10, %c0_11] : memref<16x96xf32, #tpu.memory_space<vmem>>, vector<16x96xf32>
      %c0_12 = arith.constant 0 : index
      %c0_13 = arith.constant 0 : index
      %13 = vector.load %arg5[%c0_12, %c0_13] : memref<16x96xf32, #tpu.memory_space<vmem>>, vector<16x96xf32>
      tpu.vector_store %arg5[%c0_12, %c0_13], %12 {strides = array<i32>} : memref<16x96xf32, #tpu.memory_space<vmem>>, vector<16x96xf32>,
    } else {
    }
    return
  }
  func.func @transform_0(%arg0: i32, %arg1: i32, %arg2: i32) -> (i32, i32) {
    %c0_i32 = arith.constant 0 : i32
    return %arg0, %arg2 : i32, i32
  }
  func.func @transform_1(%arg0: i32, %arg1: i32, %arg2: i32) -> (i32, i32) {
    %c0_i32 = arith.constant 0 : i32
    return %arg2, %arg1 : i32, i32
  }
  func.func @transform_2(%arg0: i32, %arg1: i32, %arg2: i32) -> (i32, i32) {
    %c0_i32 = arith.constant 0 : i32
    return %arg0, %arg1 : i32, i32
  }
}

module attributes {stable_mosaic.version = 11 : i64} {
  func.func @_matmul_kernel(%arg0: i32, %arg1: i32, %arg2: i32, %arg3: memref<16x32xf32, #tpu.memory_space<vmem>>, %arg4: memref<32x32xf32, #tpu.memory_space<vmem>>, %arg5: memref<16x32xf32, #tpu.memory_space<vmem>>, %arg6: memref<16x32xf32, #tpu.memory_space<vmem>>) attributes {dimension_semantics = [#tpu.dimension_semantics<parallel>, #tpu.dimension_semantics<parallel>, #tpu.dimension_semantics<arbitrary>], iteration_bounds = array<i64: 1, 1, 1>, scalar_prefetch = 0 : i64, scratch_operands = 1 : i64, tpu.core_type = #tpu.core_type<tc>, window_params = [{transform_indices = @transform_0, window_bounds = array<i64: 16, 32>}, {transform_indices = @transform_1, window_bounds = array<i64: 32, 32>}, {transform_indices = @transform_2, window_bounds = array<i64: 16, 32>}]} {
    %c0_i32 = arith.constant 0 : i32
    %0 = arith.cmpi eq, %arg2, %c0_i32 : i32
    %1 = arith.extui %0 : i1 to i32
    %c0_i32_0 = arith.constant 0 : i32
    %2 = arith.cmpi ne, %1, %c0_i32_0 : i32
    scf.if %2 {
      %cst_10 = arith.constant 0.000000e+00 : f32
      %12 = vector.broadcast %cst_10 : f32 to vector<16x32xf32>
      %c0_11 = arith.constant 0 : index
      %c0_12 = arith.constant 0 : index
      %13 = vector.load %arg6[%c0_11, %c0_12] : memref<16x32xf32, #tpu.memory_space<vmem>>, vector<16x32xf32>
      tpu.vector_store %arg6[%c0_11, %c0_12], %12 {strides = array<i32>} : memref<16x32xf32, #tpu.memory_space<vmem>>, vector<16x32xf32>,
    } else {
    }
    %c0 = arith.constant 0 : index
    %c0_1 = arith.constant 0 : index
    %3 = vector.load %arg6[%c0, %c0_1] : memref<16x32xf32, #tpu.memory_space<vmem>>, vector<16x32xf32>
    %c0_2 = arith.constant 0 : index
    %c0_3 = arith.constant 0 : index
    %4 = vector.load %arg3[%c0_2, %c0_3] : memref<16x32xf32, #tpu.memory_space<vmem>>, vector<16x32xf32>
    %c0_4 = arith.constant 0 : index
    %c0_5 = arith.constant 0 : index
    %5 = vector.load %arg4[%c0_4, %c0_5] : memref<32x32xf32, #tpu.memory_space<vmem>>, vector<32x32xf32>
    %cst = arith.constant dense<0.000000e+00> : vector<16x32xf32>
    %6 = tpu.matmul %4, %5, %cst {dimension_numbers = #tpu.dot_dimension_numbers<[1], [0], [0], [1], [0, 0, 1, 1], [], []>} : vector<16x32xf32>, vector<32x32xf32>, vector<16x32xf32> -> vector<16x32xf32>
    %7 = arith.addf %3, %6 : vector<16x32xf32>
    %c0_6 = arith.constant 0 : index
    %c0_7 = arith.constant 0 : index
    %8 = vector.load %arg6[%c0_6, %c0_7] : memref<16x32xf32, #tpu.memory_space<vmem>>, vector<16x32xf32>
    tpu.vector_store %arg6[%c0_6, %c0_7], %7 {strides = array<i32>} : memref<16x32xf32, #tpu.memory_space<vmem>>, vector<16x32xf32>,
    %c0_i32_8 = arith.constant 0 : i32
    %9 = arith.cmpi eq, %arg2, %c0_i32_8 : i32
    %10 = arith.extui %9 : i1 to i32
    %c0_i32_9 = arith.constant 0 : i32
    %11 = arith.cmpi ne, %10, %c0_i32_9 : i32
    scf.if %11 {
      %c0_10 = arith.constant 0 : index
      %c0_11 = arith.constant 0 : index
      %12 = vector.load %arg6[%c0_10, %c0_11] : memref<16x32xf32, #tpu.memory_space<vmem>>, vector<16x32xf32>
      %c0_12 = arith.constant 0 : index
      %c0_13 = arith.constant 0 : index
      %13 = vector.load %arg5[%c0_12, %c0_13] : memref<16x32xf32, #tpu.memory_space<vmem>>, vector<16x32xf32>
      tpu.vector_store %arg5[%c0_12, %c0_13], %12 {strides = array<i32>} : memref<16x32xf32, #tpu.memory_space<vmem>>, vector<16x32xf32>,
    } else {
    }
    return
  }
  func.func @transform_0(%arg0: i32, %arg1: i32, %arg2: i32) -> (i32, i32) {
    %c0_i32 = arith.constant 0 : i32
    return %arg0, %arg2 : i32, i32
  }
  func.func @transform_1(%arg0: i32, %arg1: i32, %arg2: i32) -> (i32, i32) {
    %c0_i32 = arith.constant 0 : i32
    return %arg2, %arg1 : i32, i32
  }
  func.func @transform_2(%arg0: i32, %arg1: i32, %arg2: i32) -> (i32, i32) {
    %c0_i32 = arith.constant 0 : i32
    return %arg0, %arg1 : i32, i32
  }
}

module attributes {stable_mosaic.version = 11 : i64} {
  func.func @_attn_kernel(%arg0: i32, %arg1: i32, %arg2: i32, %arg3: memref<1x8x32xf32, #tpu.memory_space<vmem>>, %arg4: memref<1x8x32xf32, #tpu.memory_space<vmem>>, %arg5: memref<1x8x32xf32, #tpu.memory_space<vmem>>, %arg6: memref<1x1x8xf32, #tpu.memory_space<vmem>>, %arg7: memref<1x8x32xf32, #tpu.memory_space<vmem>>, %arg8: memref<8x4xf32, #tpu.memory_space<vmem>>, %arg9: memref<8x4xf32, #tpu.memory_space<vmem>>, %arg10: memref<8x32xf32, #tpu.memory_space<vmem>>) attributes {dimension_semantics = [#tpu.dimension_semantics<parallel>, #tpu.dimension_semantics<parallel>, #tpu.dimension_semantics<arbitrary>], iteration_bounds = array<i64: 2, 1, 1>, scalar_prefetch = 0 : i64, scratch_operands = 3 : i64, tpu.core_type = #tpu.core_type<tc>, window_params = [{transform_indices = @transform_0, window_bounds = array<i64: 1, 8, 32>}, {transform_indices = @transform_1, window_bounds = array<i64: 1, 8, 32>}, {transform_indices = @transform_2, window_bounds = array<i64: 1, 8, 32>}, {transform_indices = @transform_3, window_bounds = array<i64: 1, 1, 8>}, {transform_indices = @transform_4, window_bounds = array<i64: 1, 8, 32>}]} {
    %c0_i32 = arith.constant 0 : i32
    %0 = arith.cmpi eq, %arg2, %c0_i32 : i32
    %1 = arith.extui %0 : i1 to i32
    %c0_i32_0 = arith.constant 0 : i32
    %2 = arith.cmpi ne, %1, %c0_i32_0 : i32
    scf.if %2 {
      %cst_103 = arith.constant 0xFF800000 : f32
      %142 = vector.broadcast %cst_103 : f32 to vector<8x4xf32>
      %c0_104 = arith.constant 0 : index
      %c0_105 = arith.constant 0 : index
      %143 = vector.load %arg8[%c0_104, %c0_105] : memref<8x4xf32, #tpu.memory_space<vmem>>, vector<8x4xf32>
      tpu.vector_store %arg8[%c0_104, %c0_105], %142 {strides = array<i32>} : memref<8x4xf32, #tpu.memory_space<vmem>>, vector<8x4xf32>,
      %cst_106 = arith.constant 0.000000e+00 : f32
      %144 = vector.broadcast %cst_106 : f32 to vector<8x4xf32>
      %c0_107 = arith.constant 0 : index
      %c0_108 = arith.constant 0 : index
      %145 = vector.load %arg9[%c0_107, %c0_108] : memref<8x4xf32, #tpu.memory_space<vmem>>, vector<8x4xf32>
      tpu.vector_store %arg9[%c0_107, %c0_108], %144 {strides = array<i32>} : memref<8x4xf32, #tpu.memory_space<vmem>>, vector<8x4xf32>,
      %cst_109 = arith.constant 0.000000e+00 : f32
      %146 = vector.broadcast %cst_109 : f32 to vector<8x32xf32>
      %c0_110 = arith.constant 0 : index
      %c0_111 = arith.constant 0 : index
      %147 = vector.load %arg10[%c0_110, %c0_111] : memref<8x32xf32, #tpu.memory_space<vmem>>, vector<8x32xf32>
      tpu.vector_store %arg10[%c0_110, %c0_111], %146 {strides = array<i32>} : memref<8x32xf32, #tpu.memory_space<vmem>>, vector<8x32xf32>,
    } else {
    }
    %c0 = arith.constant 0 : index
    %c0_1 = arith.constant 0 : index
    %c0_2 = arith.constant 0 : index
    %3 = vector.load %arg6[%c0, %c0_1, %c0_2] : memref<1x1x8xf32, #tpu.memory_space<vmem>>, vector<1x1x8xf32>
    %4 = vector.shape_cast %3 : vector<1x1x8xf32> to vector<1x8xf32>
    %cst = arith.constant 5.000000e-01 : f32
    %5 = vector.broadcast %cst : f32 to vector<1x8xf32>
    %6 = arith.cmpf ogt, %4, %5 : vector<1x8xf32>
    %c0_3 = arith.constant 0 : index
    %c0_4 = arith.constant 0 : index
    %c0_5 = arith.constant 0 : index
    %7 = vector.load %arg3[%c0_3, %c0_4, %c0_5] : memref<1x8x32xf32, #tpu.memory_space<vmem>>, vector<1x8x8xf32>
    %8 = vector.shape_cast %7 : vector<1x8x8xf32> to vector<8x8xf32>
    %c0_6 = arith.constant 0 : index
    %c0_7 = arith.constant 0 : index
    %c0_8 = arith.constant 0 : index
    %9 = vector.load %arg4[%c0_6, %c0_7, %c0_8] : memref<1x8x32xf32, #tpu.memory_space<vmem>>, vector<1x8x8xf32>
    %10 = vector.shape_cast %9 : vector<1x8x8xf32> to vector<8x8xf32>
    %cst_9 = arith.constant dense<0.000000e+00> : vector<8x8xf32>
    %11 = tpu.matmul %8, %10, %cst_9 {dimension_numbers = #tpu.dot_dimension_numbers<[1], [1], [0], [0], [0, 0, 1, 0], [], []>} : vector<8x8xf32>, vector<8x8xf32>, vector<8x8xf32> -> vector<8x8xf32>
    %cst_10 = arith.constant -1.000000e+06 : f32
    %12 = vector.shape_cast %6 : vector<1x8xi1> to vector<1x8xi1>
    %13 = vector.broadcast %12 : vector<1x8xi1> to vector<8x8xi1>
    %14 = vector.broadcast %cst_10 : f32 to vector<8x8xf32>
    %15 = arith.select %13, %11, %14 : vector<8x8xi1>, vector<8x8xf32>
    %c0_11 = arith.constant 0 : index
    %c0_12 = arith.constant 0 : index
    %16 = vector.load %arg8[%c0_11, %c0_12] : memref<8x4xf32, #tpu.memory_space<vmem>>, vector<8x1xf32>
    %cst_13 = arith.constant dense<0xFF800000> : vector<8xf32>
    %17 = vector.multi_reduction <maximumf>, %15, %cst_13 [1] : vector<8x8xf32> to vector<8xf32>
    %18 = vector.shape_cast %17 : vector<8xf32> to vector<8x1xf32>
    %19 = arith.maximumf %16, %18 : vector<8x1xf32>
    %20 = arith.subf %16, %19 : vector<8x1xf32>
    %21 = math.exp %20 : vector<8x1xf32>
    %22 = vector.broadcast %19 : vector<8x1xf32> to vector<8x8xf32>
    %23 = arith.subf %15, %22 : vector<8x8xf32>
    %24 = math.exp %23 : vector<8x8xf32>
    %c0_14 = arith.constant 0 : index
    %c0_15 = arith.constant 0 : index
    %25 = vector.load %arg9[%c0_14, %c0_15] : memref<8x4xf32, #tpu.memory_space<vmem>>, vector<8x1xf32>
    %26 = arith.mulf %21, %25 : vector<8x1xf32>
    %cst_16 = arith.constant dense<0.000000e+00> : vector<8xf32>
    %27 = vector.multi_reduction <add>, %24, %cst_16 [1] : vector<8x8xf32> to vector<8xf32>
    %28 = vector.shape_cast %27 : vector<8xf32> to vector<8x1xf32>
    %29 = arith.addf %26, %28 : vector<8x1xf32>
    %c0_17 = arith.constant 0 : index
    %c0_18 = arith.constant 0 : index
    %30 = vector.load %arg9[%c0_17, %c0_18] : memref<8x4xf32, #tpu.memory_space<vmem>>, vector<8x1xf32>
    tpu.vector_store %arg9[%c0_17, %c0_18], %29 {strides = array<i32>} : memref<8x4xf32, #tpu.memory_space<vmem>>, vector<8x1xf32>,
    %c0_19 = arith.constant 0 : index
    %c0_20 = arith.constant 0 : index
    %c0_21 = arith.constant 0 : index
    %31 = vector.load %arg5[%c0_19, %c0_20, %c0_21] : memref<1x8x32xf32, #tpu.memory_space<vmem>>, vector<1x8x8xf32>
    %32 = vector.shape_cast %31 : vector<1x8x8xf32> to vector<8x8xf32>
    %cst_22 = arith.constant dense<0.000000e+00> : vector<8x8xf32>
    %33 = tpu.matmul %24, %32, %cst_22 {dimension_numbers = #tpu.dot_dimension_numbers<[1], [0], [0], [1], [0, 0, 1, 1], [], []>} : vector<8x8xf32>, vector<8x8xf32>, vector<8x8xf32> -> vector<8x8xf32>
    %c0_23 = arith.constant 0 : index
    %c0_24 = arith.constant 0 : index
    %34 = vector.load %arg10[%c0_23, %c0_24] : memref<8x32xf32, #tpu.memory_space<vmem>>, vector<8x8xf32>
    %35 = vector.broadcast %21 : vector<8x1xf32> to vector<8x8xf32>
    %36 = arith.mulf %35, %34 : vector<8x8xf32>
    %37 = arith.addf %36, %33 : vector<8x8xf32>
    %c0_25 = arith.constant 0 : index
    %c0_26 = arith.constant 0 : index
    %38 = vector.load %arg10[%c0_25, %c0_26] : memref<8x32xf32, #tpu.memory_space<vmem>>, vector<8x8xf32>
    tpu.vector_store %arg10[%c0_25, %c0_26], %37 {strides = array<i32>} : memref<8x32xf32, #tpu.memory_space<vmem>>, vector<8x8xf32>,
    %c0_27 = arith.constant 0 : index
    %c0_28 = arith.constant 0 : index
    %39 = vector.load %arg8[%c0_27, %c0_28] : memref<8x4xf32, #tpu.memory_space<vmem>>, vector<8x1xf32>
    tpu.vector_store %arg8[%c0_27, %c0_28], %19 {strides = array<i32>} : memref<8x4xf32, #tpu.memory_space<vmem>>, vector<8x1xf32>,
    %c0_29 = arith.constant 0 : index
    %c0_30 = arith.constant 0 : index
    %c8 = arith.constant 8 : index
    %40 = vector.load %arg3[%c0_29, %c0_30, %c8] : memref<1x8x32xf32, #tpu.memory_space<vmem>>, vector<1x8x8xf32>
    %41 = vector.shape_cast %40 : vector<1x8x8xf32> to vector<8x8xf32>
    %c0_31 = arith.constant 0 : index
    %c0_32 = arith.constant 0 : index
    %c8_33 = arith.constant 8 : index
    %42 = vector.load %arg4[%c0_31, %c0_32, %c8_33] : memref<1x8x32xf32, #tpu.memory_space<vmem>>, vector<1x8x8xf32>
    %43 = vector.shape_cast %42 : vector<1x8x8xf32> to vector<8x8xf32>
    %cst_34 = arith.constant dense<0.000000e+00> : vector<8x8xf32>
    %44 = tpu.matmul %41, %43, %cst_34 {dimension_numbers = #tpu.dot_dimension_numbers<[1], [1], [0], [0], [0, 0, 1, 0], [], []>} : vector<8x8xf32>, vector<8x8xf32>, vector<8x8xf32> -> vector<8x8xf32>
    %cst_35 = arith.constant -1.000000e+06 : f32
    %45 = vector.shape_cast %6 : vector<1x8xi1> to vector<1x8xi1>
    %46 = vector.broadcast %45 : vector<1x8xi1> to vector<8x8xi1>
    %47 = vector.broadcast %cst_35 : f32 to vector<8x8xf32>
    %48 = arith.select %46, %44, %47 : vector<8x8xi1>, vector<8x8xf32>
    %c0_36 = arith.constant 0 : index
    %c1 = arith.constant 1 : index
    %49 = vector.load %arg8[%c0_36, %c1] : memref<8x4xf32, #tpu.memory_space<vmem>>, vector<8x1xf32>
    %cst_37 = arith.constant dense<0xFF800000> : vector<8xf32>
    %50 = vector.multi_reduction <maximumf>, %48, %cst_37 [1] : vector<8x8xf32> to vector<8xf32>
    %51 = vector.shape_cast %50 : vector<8xf32> to vector<8x1xf32>
    %52 = arith.maximumf %49, %51 : vector<8x1xf32>
    %53 = arith.subf %49, %52 : vector<8x1xf32>
    %54 = math.exp %53 : vector<8x1xf32>
    %55 = vector.broadcast %52 : vector<8x1xf32> to vector<8x8xf32>
    %56 = arith.subf %48, %55 : vector<8x8xf32>
    %57 = math.exp %56 : vector<8x8xf32>
    %c0_38 = arith.constant 0 : index
    %c1_39 = arith.constant 1 : index
    %58 = vector.load %arg9[%c0_38, %c1_39] : memref<8x4xf32, #tpu.memory_space<vmem>>, vector<8x1xf32>
    %59 = arith.mulf %54, %58 : vector<8x1xf32>
    %cst_40 = arith.constant dense<0.000000e+00> : vector<8xf32>
    %60 = vector.multi_reduction <add>, %57, %cst_40 [1] : vector<8x8xf32> to vector<8xf32>
    %61 = vector.shape_cast %60 : vector<8xf32> to vector<8x1xf32>
    %62 = arith.addf %59, %61 : vector<8x1xf32>
    %c0_41 = arith.constant 0 : index
    %c1_42 = arith.constant 1 : index
    %63 = vector.load %arg9[%c0_41, %c1_42] : memref<8x4xf32, #tpu.memory_space<vmem>>, vector<8x1xf32>
    tpu.vector_store %arg9[%c0_41, %c1_42], %62 {strides = array<i32>} : memref<8x4xf32, #tpu.memory_space<vmem>>, vector<8x1xf32>,
    %c0_43 = arith.constant 0 : index
    %c0_44 = arith.constant 0 : index
    %c8_45 = arith.constant 8 : index
    %64 = vector.load %arg5[%c0_43, %c0_44, %c8_45] : memref<1x8x32xf32, #tpu.memory_space<vmem>>, vector<1x8x8xf32>
    %65 = vector.shape_cast %64 : vector<1x8x8xf32> to vector<8x8xf32>
    %cst_46 = arith.constant dense<0.000000e+00> : vector<8x8xf32>
    %66 = tpu.matmul %57, %65, %cst_46 {dimension_numbers = #tpu.dot_dimension_numbers<[1], [0], [0], [1], [0, 0, 1, 1], [], []>} : vector<8x8xf32>, vector<8x8xf32>, vector<8x8xf32> -> vector<8x8xf32>
    %c0_47 = arith.constant 0 : index
    %c8_48 = arith.constant 8 : index
    %67 = vector.load %arg10[%c0_47, %c8_48] : memref<8x32xf32, #tpu.memory_space<vmem>>, vector<8x8xf32>
    %68 = vector.broadcast %54 : vector<8x1xf32> to vector<8x8xf32>
    %69 = arith.mulf %68, %67 : vector<8x8xf32>
    %70 = arith.addf %69, %66 : vector<8x8xf32>
    %c0_49 = arith.constant 0 : index
    %c8_50 = arith.constant 8 : index
    %71 = vector.load %arg10[%c0_49, %c8_50] : memref<8x32xf32, #tpu.memory_space<vmem>>, vector<8x8xf32>
    tpu.vector_store %arg10[%c0_49, %c8_50], %70 {strides = array<i32>} : memref<8x32xf32, #tpu.memory_space<vmem>>, vector<8x8xf32>,
    %c0_51 = arith.constant 0 : index
    %c1_52 = arith.constant 1 : index
    %72 = vector.load %arg8[%c0_51, %c1_52] : memref<8x4xf32, #tpu.memory_space<vmem>>, vector<8x1xf32>
    tpu.vector_store %arg8[%c0_51, %c1_52], %52 {strides = array<i32>} : memref<8x4xf32, #tpu.memory_space<vmem>>, vector<8x1xf32>,
    %c0_53 = arith.constant 0 : index
    %c0_54 = arith.constant 0 : index
    %c16 = arith.constant 16 : index
    %73 = vector.load %arg3[%c0_53, %c0_54, %c16] : memref<1x8x32xf32, #tpu.memory_space<vmem>>, vector<1x8x8xf32>
    %74 = vector.shape_cast %73 : vector<1x8x8xf32> to vector<8x8xf32>
    %c0_55 = arith.constant 0 : index
    %c0_56 = arith.constant 0 : index
    %c16_57 = arith.constant 16 : index
    %75 = vector.load %arg4[%c0_55, %c0_56, %c16_57] : memref<1x8x32xf32, #tpu.memory_space<vmem>>, vector<1x8x8xf32>
    %76 = vector.shape_cast %75 : vector<1x8x8xf32> to vector<8x8xf32>
    %cst_58 = arith.constant dense<0.000000e+00> : vector<8x8xf32>
    %77 = tpu.matmul %74, %76, %cst_58 {dimension_numbers = #tpu.dot_dimension_numbers<[1], [1], [0], [0], [0, 0, 1, 0], [], []>} : vector<8x8xf32>, vector<8x8xf32>, vector<8x8xf32> -> vector<8x8xf32>
    %cst_59 = arith.constant -1.000000e+06 : f32
    %78 = vector.shape_cast %6 : vector<1x8xi1> to vector<1x8xi1>
    %79 = vector.broadcast %78 : vector<1x8xi1> to vector<8x8xi1>
    %80 = vector.broadcast %cst_59 : f32 to vector<8x8xf32>
    %81 = arith.select %79, %77, %80 : vector<8x8xi1>, vector<8x8xf32>
    %c0_60 = arith.constant 0 : index
    %c2 = arith.constant 2 : index
    %82 = vector.load %arg8[%c0_60, %c2] : memref<8x4xf32, #tpu.memory_space<vmem>>, vector<8x1xf32>
    %cst_61 = arith.constant dense<0xFF800000> : vector<8xf32>
    %83 = vector.multi_reduction <maximumf>, %81, %cst_61 [1] : vector<8x8xf32> to vector<8xf32>
    %84 = vector.shape_cast %83 : vector<8xf32> to vector<8x1xf32>
    %85 = arith.maximumf %82, %84 : vector<8x1xf32>
    %86 = arith.subf %82, %85 : vector<8x1xf32>
    %87 = math.exp %86 : vector<8x1xf32>
    %88 = vector.broadcast %85 : vector<8x1xf32> to vector<8x8xf32>
    %89 = arith.subf %81, %88 : vector<8x8xf32>
    %90 = math.exp %89 : vector<8x8xf32>
    %c0_62 = arith.constant 0 : index
    %c2_63 = arith.constant 2 : index
    %91 = vector.load %arg9[%c0_62, %c2_63] : memref<8x4xf32, #tpu.memory_space<vmem>>, vector<8x1xf32>
    %92 = arith.mulf %87, %91 : vector<8x1xf32>
    %cst_64 = arith.constant dense<0.000000e+00> : vector<8xf32>
    %93 = vector.multi_reduction <add>, %90, %cst_64 [1] : vector<8x8xf32> to vector<8xf32>
    %94 = vector.shape_cast %93 : vector<8xf32> to vector<8x1xf32>
    %95 = arith.addf %92, %94 : vector<8x1xf32>
    %c0_65 = arith.constant 0 : index
    %c2_66 = arith.constant 2 : index
    %96 = vector.load %arg9[%c0_65, %c2_66] : memref<8x4xf32, #tpu.memory_space<vmem>>, vector<8x1xf32>
    tpu.vector_store %arg9[%c0_65, %c2_66], %95 {strides = array<i32>} : memref<8x4xf32, #tpu.memory_space<vmem>>, vector<8x1xf32>,
    %c0_67 = arith.constant 0 : index
    %c0_68 = arith.constant 0 : index
    %c16_69 = arith.constant 16 : index
    %97 = vector.load %arg5[%c0_67, %c0_68, %c16_69] : memref<1x8x32xf32, #tpu.memory_space<vmem>>, vector<1x8x8xf32>
    %98 = vector.shape_cast %97 : vector<1x8x8xf32> to vector<8x8xf32>
    %cst_70 = arith.constant dense<0.000000e+00> : vector<8x8xf32>
    %99 = tpu.matmul %90, %98, %cst_70 {dimension_numbers = #tpu.dot_dimension_numbers<[1], [0], [0], [1], [0, 0, 1, 1], [], []>} : vector<8x8xf32>, vector<8x8xf32>, vector<8x8xf32> -> vector<8x8xf32>
    %c0_71 = arith.constant 0 : index
    %c16_72 = arith.constant 16 : index
    %100 = vector.load %arg10[%c0_71, %c16_72] : memref<8x32xf32, #tpu.memory_space<vmem>>, vector<8x8xf32>
    %101 = vector.broadcast %87 : vector<8x1xf32> to vector<8x8xf32>
    %102 = arith.mulf %101, %100 : vector<8x8xf32>
    %103 = arith.addf %102, %99 : vector<8x8xf32>
    %c0_73 = arith.constant 0 : index
    %c16_74 = arith.constant 16 : index
    %104 = vector.load %arg10[%c0_73, %c16_74] : memref<8x32xf32, #tpu.memory_space<vmem>>, vector<8x8xf32>
    tpu.vector_store %arg10[%c0_73, %c16_74], %103 {strides = array<i32>} : memref<8x32xf32, #tpu.memory_space<vmem>>, vector<8x8xf32>,
    %c0_75 = arith.constant 0 : index
    %c2_76 = arith.constant 2 : index
    %105 = vector.load %arg8[%c0_75, %c2_76] : memref<8x4xf32, #tpu.memory_space<vmem>>, vector<8x1xf32>
    tpu.vector_store %arg8[%c0_75, %c2_76], %85 {strides = array<i32>} : memref<8x4xf32, #tpu.memory_space<vmem>>, vector<8x1xf32>,
    %c0_77 = arith.constant 0 : index
    %c0_78 = arith.constant 0 : index
    %c24 = arith.constant 24 : index
    %106 = vector.load %arg3[%c0_77, %c0_78, %c24] : memref<1x8x32xf32, #tpu.memory_space<vmem>>, vector<1x8x8xf32>
    %107 = vector.shape_cast %106 : vector<1x8x8xf32> to vector<8x8xf32>
    %c0_79 = arith.constant 0 : index
    %c0_80 = arith.constant 0 : index
    %c24_81 = arith.constant 24 : index
    %108 = vector.load %arg4[%c0_79, %c0_80, %c24_81] : memref<1x8x32xf32, #tpu.memory_space<vmem>>, vector<1x8x8xf32>
    %109 = vector.shape_cast %108 : vector<1x8x8xf32> to vector<8x8xf32>
    %cst_82 = arith.constant dense<0.000000e+00> : vector<8x8xf32>
    %110 = tpu.matmul %107, %109, %cst_82 {dimension_numbers = #tpu.dot_dimension_numbers<[1], [1], [0], [0], [0, 0, 1, 0], [], []>} : vector<8x8xf32>, vector<8x8xf32>, vector<8x8xf32> -> vector<8x8xf32>
    %cst_83 = arith.constant -1.000000e+06 : f32
    %111 = vector.shape_cast %6 : vector<1x8xi1> to vector<1x8xi1>
    %112 = vector.broadcast %111 : vector<1x8xi1> to vector<8x8xi1>
    %113 = vector.broadcast %cst_83 : f32 to vector<8x8xf32>
    %114 = arith.select %112, %110, %113 : vector<8x8xi1>, vector<8x8xf32>
    %c0_84 = arith.constant 0 : index
    %c3 = arith.constant 3 : index
    %115 = vector.load %arg8[%c0_84, %c3] : memref<8x4xf32, #tpu.memory_space<vmem>>, vector<8x1xf32>
    %cst_85 = arith.constant dense<0xFF800000> : vector<8xf32>
    %116 = vector.multi_reduction <maximumf>, %114, %cst_85 [1] : vector<8x8xf32> to vector<8xf32>
    %117 = vector.shape_cast %116 : vector<8xf32> to vector<8x1xf32>
    %118 = arith.maximumf %115, %117 : vector<8x1xf32>
    %119 = arith.subf %115, %118 : vector<8x1xf32>
    %120 = math.exp %119 : vector<8x1xf32>
    %121 = vector.broadcast %118 : vector<8x1xf32> to vector<8x8xf32>
    %122 = arith.subf %114, %121 : vector<8x8xf32>
    %123 = math.exp %122 : vector<8x8xf32>
    %c0_86 = arith.constant 0 : index
    %c3_87 = arith.constant 3 : index
    %124 = vector.load %arg9[%c0_86, %c3_87] : memref<8x4xf32, #tpu.memory_space<vmem>>, vector<8x1xf32>
    %125 = arith.mulf %120, %124 : vector<8x1xf32>
    %cst_88 = arith.constant dense<0.000000e+00> : vector<8xf32>
    %126 = vector.multi_reduction <add>, %123, %cst_88 [1] : vector<8x8xf32> to vector<8xf32>
    %127 = vector.shape_cast %126 : vector<8xf32> to vector<8x1xf32>
    %128 = arith.addf %125, %127 : vector<8x1xf32>
    %c0_89 = arith.constant 0 : index
    %c3_90 = arith.constant 3 : index
    %129 = vector.load %arg9[%c0_89, %c3_90] : memref<8x4xf32, #tpu.memory_space<vmem>>, vector<8x1xf32>
    tpu.vector_store %arg9[%c0_89, %c3_90], %128 {strides = array<i32>} : memref<8x4xf32, #tpu.memory_space<vmem>>, vector<8x1xf32>,
    %c0_91 = arith.constant 0 : index
    %c0_92 = arith.constant 0 : index
    %c24_93 = arith.constant 24 : index
    %130 = vector.load %arg5[%c0_91, %c0_92, %c24_93] : memref<1x8x32xf32, #tpu.memory_space<vmem>>, vector<1x8x8xf32>
    %131 = vector.shape_cast %130 : vector<1x8x8xf32> to vector<8x8xf32>
    %cst_94 = arith.constant dense<0.000000e+00> : vector<8x8xf32>
    %132 = tpu.matmul %123, %131, %cst_94 {dimension_numbers = #tpu.dot_dimension_numbers<[1], [0], [0], [1], [0, 0, 1, 1], [], []>} : vector<8x8xf32>, vector<8x8xf32>, vector<8x8xf32> -> vector<8x8xf32>
    %c0_95 = arith.constant 0 : index
    %c24_96 = arith.constant 24 : index
    %133 = vector.load %arg10[%c0_95, %c24_96] : memref<8x32xf32, #tpu.memory_space<vmem>>, vector<8x8xf32>
    %134 = vector.broadcast %120 : vector<8x1xf32> to vector<8x8xf32>
    %135 = arith.mulf %134, %133 : vector<8x8xf32>
    %136 = arith.addf %135, %132 : vector<8x8xf32>
    %c0_97 = arith.constant 0 : index
    %c24_98 = arith.constant 24 : index
    %137 = vector.load %arg10[%c0_97, %c24_98] : memref<8x32xf32, #tpu.memory_space<vmem>>, vector<8x8xf32>
    tpu.vector_store %arg10[%c0_97, %c24_98], %136 {strides = array<i32>} : memref<8x32xf32, #tpu.memory_space<vmem>>, vector<8x8xf32>,
    %c0_99 = arith.constant 0 : index
    %c3_100 = arith.constant 3 : index
    %138 = vector.load %arg8[%c0_99, %c3_100] : memref<8x4xf32, #tpu.memory_space<vmem>>, vector<8x1xf32>
    tpu.vector_store %arg8[%c0_99, %c3_100], %118 {strides = array<i32>} : memref<8x4xf32, #tpu.memory_space<vmem>>, vector<8x1xf32>,
    %c0_i32_101 = arith.constant 0 : i32
    %139 = arith.cmpi eq, %arg2, %c0_i32_101 : i32
    %140 = arith.extui %139 : i1 to i32
    %c0_i32_102 = arith.constant 0 : i32
    %141 = arith.cmpi ne, %140, %c0_i32_102 : i32
    scf.if %141 {
      %c0_103 = arith.constant 0 : index
      %c0_104 = arith.constant 0 : index
      %142 = vector.load %arg9[%c0_103, %c0_104] : memref<8x4xf32, #tpu.memory_space<vmem>>, vector<8x1xf32>
      %143 = tpu.reciprocal %142 {approx = true} : vector<8x1xf32> -> vector<8x1xf32>
      %c0_105 = arith.constant 0 : index
      %c0_106 = arith.constant 0 : index
      %144 = vector.load %arg10[%c0_105, %c0_106] : memref<8x32xf32, #tpu.memory_space<vmem>>, vector<8x8xf32>
      %145 = vector.broadcast %143 : vector<8x1xf32> to vector<8x8xf32>
      %146 = arith.mulf %144, %145 : vector<8x8xf32>
      %c0_107 = arith.constant 0 : index
      %c0_108 = arith.constant 0 : index
      %c0_109 = arith.constant 0 : index
      %147 = vector.load %arg7[%c0_107, %c0_108, %c0_109] : memref<1x8x32xf32, #tpu.memory_space<vmem>>, vector<1x8x8xf32>
      %148 = vector.shape_cast %147 : vector<1x8x8xf32> to vector<8x8xf32>
      %149 = vector.shape_cast %146 : vector<8x8xf32> to vector<1x8x8xf32>
      tpu.vector_store %arg7[%c0_107, %c0_108, %c0_109], %149 {strides = array<i32>} : memref<1x8x32xf32, #tpu.memory_space<vmem>>, vector<1x8x8xf32>,
      %c0_110 = arith.constant 0 : index
      %c1_111 = arith.constant 1 : index
      %150 = vector.load %arg9[%c0_110, %c1_111] : memref<8x4xf32, #tpu.memory_space<vmem>>, vector<8x1xf32>
      %151 = tpu.reciprocal %150 {approx = true} : vector<8x1xf32> -> vector<8x1xf32>
      %c0_112 = arith.constant 0 : index
      %c8_113 = arith.constant 8 : index
      %152 = vector.load %arg10[%c0_112, %c8_113] : memref<8x32xf32, #tpu.memory_space<vmem>>, vector<8x8xf32>
      %153 = vector.broadcast %151 : vector<8x1xf32> to vector<8x8xf32>
      %154 = arith.mulf %152, %153 : vector<8x8xf32>
      %c0_114 = arith.constant 0 : index
      %c0_115 = arith.constant 0 : index
      %c8_116 = arith.constant 8 : index
      %155 = vector.load %arg7[%c0_114, %c0_115, %c8_116] : memref<1x8x32xf32, #tpu.memory_space<vmem>>, vector<1x8x8xf32>
      %156 = vector.shape_cast %155 : vector<1x8x8xf32> to vector<8x8xf32>
      %157 = vector.shape_cast %154 : vector<8x8xf32> to vector<1x8x8xf32>
      tpu.vector_store %arg7[%c0_114, %c0_115, %c8_116], %157 {strides = array<i32>} : memref<1x8x32xf32, #tpu.memory_space<vmem>>, vector<1x8x8xf32>,
      %c0_117 = arith.constant 0 : index
      %c2_118 = arith.constant 2 : index
      %158 = vector.load %arg9[%c0_117, %c2_118] : memref<8x4xf32, #tpu.memory_space<vmem>>, vector<8x1xf32>
      %159 = tpu.reciprocal %158 {approx = true} : vector<8x1xf32> -> vector<8x1xf32>
      %c0_119 = arith.constant 0 : index
      %c16_120 = arith.constant 16 : index
      %160 = vector.load %arg10[%c0_119, %c16_120] : memref<8x32xf32, #tpu.memory_space<vmem>>, vector<8x8xf32>
      %161 = vector.broadcast %159 : vector<8x1xf32> to vector<8x8xf32>
      %162 = arith.mulf %160, %161 : vector<8x8xf32>
      %c0_121 = arith.constant 0 : index
      %c0_122 = arith.constant 0 : index
      %c16_123 = arith.constant 16 : index
      %163 = vector.load %arg7[%c0_121, %c0_122, %c16_123] : memref<1x8x32xf32, #tpu.memory_space<vmem>>, vector<1x8x8xf32>
      %164 = vector.shape_cast %163 : vector<1x8x8xf32> to vector<8x8xf32>
      %165 = vector.shape_cast %162 : vector<8x8xf32> to vector<1x8x8xf32>
      tpu.vector_store %arg7[%c0_121, %c0_122, %c16_123], %165 {strides = array<i32>} : memref<1x8x32xf32, #tpu.memory_space<vmem>>, vector<1x8x8xf32>,
      %c0_124 = arith.constant 0 : index
      %c3_125 = arith.constant 3 : index
      %166 = vector.load %arg9[%c0_124, %c3_125] : memref<8x4xf32, #tpu.memory_space<vmem>>, vector<8x1xf32>
      %167 = tpu.reciprocal %166 {approx = true} : vector<8x1xf32> -> vector<8x1xf32>
      %c0_126 = arith.constant 0 : index
      %c24_127 = arith.constant 24 : index
      %168 = vector.load %arg10[%c0_126, %c24_127] : memref<8x32xf32, #tpu.memory_space<vmem>>, vector<8x8xf32>
      %169 = vector.broadcast %167 : vector<8x1xf32> to vector<8x8xf32>
      %170 = arith.mulf %168, %169 : vector<8x8xf32>
      %c0_128 = arith.constant 0 : index
      %c0_129 = arith.constant 0 : index
      %c24_130 = arith.constant 24 : index
      %171 = vector.load %arg7[%c0_128, %c0_129, %c24_130] : memref<1x8x32xf32, #tpu.memory_space<vmem>>, vector<1x8x8xf32>
      %172 = vector.shape_cast %171 : vector<1x8x8xf32> to vector<8x8xf32>
      %173 = vector.shape_cast %170 : vector<8x8xf32> to vector<1x8x8xf32>
      tpu.vector_store %arg7[%c0_128, %c0_129, %c24_130], %173 {strides = array<i32>} : memref<1x8x32xf32, #tpu.memory_space<vmem>>, vector<1x8x8xf32>,
    } else {
    }
    return
  }
  func.func @transform_0(%arg0: i32, %arg1: i32, %arg2: i32) -> (i32, i32, i32) {
    %c0_i32 = arith.constant 0 : i32
    %c0_i32_0 = arith.constant 0 : i32
    return %arg0, %arg1, %c0_i32 : i32, i32, i32
  }
  func.func @transform_1(%arg0: i32, %arg1: i32, %arg2: i32) -> (i32, i32, i32) {
    %c0_i32 = arith.constant 0 : i32
    %c0_i32_0 = arith.constant 0 : i32
    return %arg0, %arg2, %c0_i32 : i32, i32, i32
  }
  func.func @transform_2(%arg0: i32, %arg1: i32, %arg2: i32) -> (i32, i32, i32) {
    %c0_i32 = arith.constant 0 : i32
    %c0_i32_0 = arith.constant 0 : i32
    return %arg0, %arg2, %c0_i32 : i32, i32, i32
  }
  func.func @transform_3(%arg0: i32, %arg1: i32, %arg2: i32) -> (i32, i32, i32) {
    %c0_i32 = arith.constant 0 : i32
    %c0_i32_0 = arith.constant 0 : i32
    return %arg0, %c0_i32, %arg2 : i32, i32, i32
  }
  func.func @transform_4(%arg0: i32, %arg1: i32, %arg2: i32) -> (i32, i32, i32) {
    %c0_i32 = arith.constant 0 : i32
    %c0_i32_0 = arith.constant 0 : i32
    return %arg0, %arg1, %c0_i32 : i32, i32, i32
  }
}

</mosaic_0001>

<llo_original>
// kernel: _mha_self.3
$region0: #{_mha_self.3}
  #allocation0 [shape = 'u32[]', space=smem, size = 0x4, offset = 0x4, fixed_abs, tag = 'smem constant byte address 0x4 - core index']
  #allocation1 [shape = 'u32[72,128]{1,0:T(1,128)}', space=vmem, size = 0x9000, scoped, tag = 'internal scratch']
  #allocation2 [shape = 'f32[16,96]{1,0:T(8,128)}', space=vmem, size = 0x2000, scoped, tag = 'scratch operand']
  %s0 = inlined_call_operand.hbm [shape: f32[16,32], index: 0, kind: input, shape index: {}]
  %s1 = inlined_call_operand.hbm [shape: f32[32,96], index: 1, kind: input, shape index: {}]
  %s2 = inlined_call_operand.vmem [shape: f32[16,96], index: 2, kind: output, shape index: {}]
  %s3 = sld [smem:[#allocation0]]
  $region34: #{_mha_self.3} parent=0
    _
  %s5 = ssub.s32 1, %s3
  %s6 = scalar_select 0, %s5, %s3
  $region1: #{_mha_self.3} parent=0
    #allocation3 [shape = 'u8[8192]{0}', space=vmem, size = 0x2000, scoped, tag = 'input window, operand 0, single buffered']
    #allocation4 [shape = 's32[1]{0}', space=sflag, size = 0x4, scoped, tag = 'scoped memory for _mha_self.3']
    #allocation5 [shape = 'u8[16384]{0}', space=vmem, size = 0x4000, scoped, tag = 'input window, operand 1, single buffered']
    #allocation6 [shape = 's32[1]{0}', space=sflag, size = 0x4, scoped, tag = 'scoped memory for _mha_self.3']
    %7 = vsyncpa [#allocation4], 0
    %8 = vsyncpa [#allocation6], 0
    // Predicated region
    $region2: #{_mha_self.3} parent=1 // pred_check
      _
    $region3: #{_mha_self.3} parent=1 // pred_check_branch
      %10 = sbr.rel (0) target = $region5
    $region4: #{_mha_self.3} parent=1 // pred_region
      %12 = vsyncadd [#allocation4], 0
      %s13 = sshll.u32 %s0, 4
      %s14 = int_to_ptr.hbm [resolvable:$true] %s13
      %s15 = sshll.u32 [#allocation3], 4
      %s16 = int_to_ptr.vmem [resolvable:$true] %s15
      %21 = dma.hbm_to_vmem [thread:$0]  %s14, 256, %s16, [#allocation4], 128, 128, 8
    $region5: #{_mha_self.3} parent=1 // pred_fallthru
      _
    // Predicated region
    $region6: #{_mha_self.3} parent=1 // pred_check
      _
    $region7: #{_mha_self.3} parent=1 // pred_check_branch
      %23 = sbr.rel (0) target = $region9
    $region8: #{_mha_self.3} parent=1 // pred_region
      %25 = vsyncadd [#allocation6], 0
      %s26 = sshll.u32 %s1, 4
      %s27 = int_to_ptr.hbm [resolvable:$true] %s26
      %s28 = sshll.u32 [#allocation5], 4
      %s29 = int_to_ptr.vmem [resolvable:$true] %s28
      %34 = dma.hbm_to_vmem [thread:$0]  %s27, 512, %s29, [#allocation6], 128, 128, 8
    $region9: #{_mha_self.3} parent=1 // pred_fallthru
      _
    // Predicated region
    $region10: #{_mha_self.3} parent=1 // pred_check
      _
    $region11: #{_mha_self.3} parent=1 // pred_check_branch
      %36 = sbr.rel (0) target = $region13
    $region12: #{_mha_self.3} parent=1 // pred_region
      %38 = dma.done [#allocation4], 256
    $region13: #{_mha_self.3} parent=1 // pred_fallthru
      _
    // Predicated region
    $region14: #{_mha_self.3} parent=1 // pred_check
      _
    $region15: #{_mha_self.3} parent=1 // pred_check_branch
      %40 = sbr.rel (0) target = $region17
    $region16: #{_mha_self.3} parent=1 // pred_region
      %42 = dma.done [#allocation6], 512
    $region17: #{_mha_self.3} parent=1 // pred_fallthru
      _
    %p43 = scmp.eq.s32.totalorder 0, 0
    // Predicated region
    $region18: #{_mha_self.3} parent=1 // pred_check
      %p44 = pneg %p43
    $region19: #{_mha_self.3} parent=1 // pred_check_branch
      %46 = sbr.rel (%p44) target = $region21
    $region20: #{_mha_self.3} parent=1 // pred_region
      %vm47 = vcmask 785408
      %48 = vst.msk [vmem:[#allocation2] sm:$0xff] %vm47, 0.0
      %49 = vst.msk [vmem:[#allocation2 + $0x8] sm:$0xff] %vm47, 0.0
    $region21: #{_mha_self.3} parent=1 // pred_fallthru
      _
    %v50 = vld [vmem:[#allocation2] sm:$0xff]
    %v51 = vld [vmem:[#allocation2 + $0x8] sm:$0xff]
    %v52 = vld [vmem:[#allocation3] sm:$0xff]
    %v53 = vld [vmem:[#allocation3 + $0x8] sm:$0xff]
    %v54 = vld [vmem:[#allocation5] sm:$0xff]
    %v55 = vld [vmem:[#allocation5 + $0x8] sm:$0xff]
    %v56 = vld [vmem:[#allocation5 + $0x10] sm:$0xff]
    %v57 = vld [vmem:[#allocation5 + $0x18] sm:$0xff]
    %vm58 = vcmask 261120
    %v60 = vsel %vm58, %v52, 0
    %v63 = vsel %vm58, %v53, 0
    %65 = vmatpush.msra.mxu0 0.0
    %66 = vmatpush.msra.mxu0 0.0
    %67 = vmatpush.msra.mxu0 0.0
    %68 = vmatpush.msra.mxu0 0.0
    %69 = vmatpush.msra.mxu0 0.0
    %70 = vmatpush.msra.mxu0 0.0
    %71 = vmatpush.msra.mxu0 0.0
    %72 = vmatpush.msra.mxu0 0.0
    %73 = vmatpush.msra.mxu0 0.0
    %74 = vmatpush.msra.mxu0 0.0
    %75 = vmatpush.msra.mxu0 0.0
    %76 = vmatpush.msra.mxu0 0.0
    %77 = vmatpush.msra.mxu0 %v57
    %78 = vmatpush.msra.mxu0 %v56
    %79 = vmatpush.msra.mxu0 %v55
    %80 = vmatpush.msra.mxu0 %v54
    %81 = vmatmul.f32.gmra.mxu0 %v60
    %v82 = vpop.f32.mrf.mxu0
    %v83 = vadd.f32 0.0, %v82
    %84 = vmatmul.f32.gmra.mxu0 %v63
    %v85 = vpop.f32.mrf.mxu0
    %v86 = vadd.f32 0.0, %v85
    %87 = vdwg.mxu0
    %v88 = vadd.f32 %v50, %v83
    %v89 = vadd.f32 %v51, %v86
    %vm90 = vcmask 785408
    %91 = vst.msk [vmem:[#allocation2] sm:$0xff] %vm90, %v88
    %92 = vst.msk [vmem:[#allocation2 + $0x8] sm:$0xff] %vm90, %v89
    // Predicated region
    $region22: #{_mha_self.3} parent=1 // pred_check
      %p93 = pneg %p43
    $region23: #{_mha_self.3} parent=1 // pred_check_branch
      %95 = sbr.rel (%p93) target = $region25
    $region24: #{_mha_self.3} parent=1 // pred_region
      %v96 = vld [vmem:[#allocation2] sm:$0xff]
      %v97 = vld [vmem:[#allocation2 + $0x8] sm:$0xff]
      %98 = vst.msk [vmem:[%s2] sm:$0xff] %vm90, %v96
      %99 = vst.msk [vmem:[%s2 + $0x8] sm:$0xff] %vm90, %v97
    $region25: #{_mha_self.3} parent=1 // pred_fallthru
      _
    // Predicated region
    $region26: #{_mha_self.3} parent=1 // pred_check
      _
    $region27: #{_mha_self.3} parent=1 // pred_check_branch
      %101 = sbr.rel (0) target = $region29
    $region28: #{_mha_self.3} parent=1 // pred_region
      _
    $region29: #{_mha_self.3} parent=1 // pred_fallthru
      _
    // Predicated region
    $region30: #{_mha_self.3} parent=1 // pred_check
      _
    $region31: #{_mha_self.3} parent=1 // pred_check_branch
      %103 = sbr.rel (0) target = $region33
    $region32: #{_mha_self.3} parent=1 // pred_region
      _
    $region33: #{_mha_self.3} parent=1 // pred_fallthru
      _
    %104 = vsyncpa [#allocation4], 1
    %105 = vsyncpa [#allocation6], 1

// kernel: _mha_self.5
$region0: #{_mha_self.5}
  #allocation0 [shape = 'u32[]', space=smem, size = 0x4, offset = 0x4, fixed_abs, tag = 'smem constant byte address 0x4 - core index']
  #allocation1 [shape = 'u32[72,128]{1,0:T(1,128)}', space=vmem, size = 0x9000, scoped, tag = 'internal scratch']
  #allocation2 [shape = 'f32[16,32]{1,0:T(8,128)}', space=vmem, size = 0x2000, scoped, tag = 'scratch operand']
  %s0 = inlined_call_operand.vmem [shape: f32[16,32], index: 0, kind: input, shape index: {}]
  %s1 = inlined_call_operand.vmem [shape: f32[32,32], index: 1, kind: input, shape index: {}]
  %s2 = inlined_call_operand.hbm [shape: f32[16,32], index: 2, kind: output, shape index: {}]
  %s3 = sld [smem:[#allocation0]]
  $region26: #{_mha_self.5} parent=0
    _
  %s5 = ssub.s32 1, %s3
  %s6 = scalar_select 0, %s5, %s3
  $region1: #{_mha_self.5} parent=0
    #allocation3 [shape = 'u8[8192]{0}', space=vmem, size = 0x2000, scoped, tag = 'output window, operand 0, single buffered']
    #allocation4 [shape = 's32[1]{0}', space=sflag, size = 0x4, scoped, tag = 'scoped memory for _mha_self.5']
    %7 = vsyncpa [#allocation4], 0
    // Predicated region
    $region2: #{_mha_self.5} parent=1 // pred_check
      _
    $region3: #{_mha_self.5} parent=1 // pred_check_branch
      %9 = sbr.rel (0) target = $region5
    $region4: #{_mha_self.5} parent=1 // pred_region
      _
    $region5: #{_mha_self.5} parent=1 // pred_fallthru
      _
    // Predicated region
    $region6: #{_mha_self.5} parent=1 // pred_check
      _
    $region7: #{_mha_self.5} parent=1 // pred_check_branch
      %11 = sbr.rel (0) target = $region9
    $region8: #{_mha_self.5} parent=1 // pred_region
      _
    $region9: #{_mha_self.5} parent=1 // pred_fallthru
      _
    %p12 = scmp.eq.s32.totalorder 0, 0
    // Predicated region
    $region10: #{_mha_self.5} parent=1 // pred_check
      %p13 = pneg %p12
    $region11: #{_mha_self.5} parent=1 // pred_check_branch
      %15 = sbr.rel (%p13) target = $region13
    $region12: #{_mha_self.5} parent=1 // pred_region
      %vm16 = vcmask 261120
      %17 = vst.msk [vmem:[#allocation2] sm:$0xff] %vm16, 0.0
      %18 = vst.msk [vmem:[#allocation2 + $0x8] sm:$0xff] %vm16, 0.0
    $region13: #{_mha_self.5} parent=1 // pred_fallthru
      _
    %v19 = vld [vmem:[#allocation2] sm:$0xff]
    %v20 = vld [vmem:[#allocation2 + $0x8] sm:$0xff]
    %v21 = vld [vmem:[%s0] sm:$0xff]
    %v22 = vld [vmem:[%s0 + $0x8] sm:$0xff]
    %v23 = vld [vmem:[%s1] sm:$0xff]
    %v24 = vld [vmem:[%s1 + $0x8] sm:$0xff]
    %v25 = vld [vmem:[%s1 + $0x10] sm:$0xff]
    %v26 = vld [vmem:[%s1 + $0x18] sm:$0xff]
    %vm27 = vcmask 261120
    %v29 = vsel %vm27, %v21, 0
    %v32 = vsel %vm27, %v22, 0
    %34 = vmatpush.msra.mxu0 0.0
    %35 = vmatpush.msra.mxu0 0.0
    %36 = vmatpush.msra.mxu0 0.0
    %37 = vmatpush.msra.mxu0 0.0
    %38 = vmatpush.msra.mxu0 0.0
    %39 = vmatpush.msra.mxu0 0.0
    %40 = vmatpush.msra.mxu0 0.0
    %41 = vmatpush.msra.mxu0 0.0
    %42 = vmatpush.msra.mxu0 0.0
    %43 = vmatpush.msra.mxu0 0.0
    %44 = vmatpush.msra.mxu0 0.0
    %45 = vmatpush.msra.mxu0 0.0
    %46 = vmatpush.msra.mxu0 %v26
    %47 = vmatpush.msra.mxu0 %v25
    %48 = vmatpush.msra.mxu0 %v24
    %49 = vmatpush.msra.mxu0 %v23
    %50 = vmatmul.f32.gmra.mxu0 %v29
    %v51 = vpop.f32.mrf.mxu0
    %v52 = vadd.f32 0.0, %v51
    %53 = vmatmul.f32.gmra.mxu0 %v32
    %v54 = vpop.f32.mrf.mxu0
    %v55 = vadd.f32 0.0, %v54
    %56 = vdwg.mxu0
    %v57 = vadd.f32 %v19, %v52
    %v58 = vadd.f32 %v20, %v55
    %59 = vst.msk [vmem:[#allocation2] sm:$0xff] %vm27, %v57
    %60 = vst.msk [vmem:[#allocation2 + $0x8] sm:$0xff] %vm27, %v58
    // Predicated region
    $region14: #{_mha_self.5} parent=1 // pred_check
      %p61 = pneg %p12
    $region15: #{_mha_self.5} parent=1 // pred_check_branch
      %63 = sbr.rel (%p61) target = $region17
    $region16: #{_mha_self.5} parent=1 // pred_region
      %v64 = vld [vmem:[#allocation2] sm:$0xff]
      %v65 = vld [vmem:[#allocation2 + $0x8] sm:$0xff]
      %66 = vst.msk [vmem:[#allocation3] sm:$0xff] %vm27, %v64
      %67 = vst.msk [vmem:[#allocation3 + $0x8] sm:$0xff] %vm27, %v65
    $region17: #{_mha_self.5} parent=1 // pred_fallthru
      _
    // Predicated region
    $region18: #{_mha_self.5} parent=1 // pred_check
      _
    $region19: #{_mha_self.5} parent=1 // pred_check_branch
      %69 = sbr.rel (0) target = $region21
    $region20: #{_mha_self.5} parent=1 // pred_region
      %71 = vsyncadd [#allocation4], 0
      %s72 = sshll.u32 [#allocation3], 4
      %s73 = int_to_ptr.vmem [resolvable:$true] %s72
      %s74 = sshll.u32 %s2, 4
      %s75 = int_to_ptr.hbm [resolvable:$true] %s74
      %80 = dma.vmem_to_hbm [thread:$0]  %s73, 256, %s75, [#allocation4], 128, 128, 8
    $region21: #{_mha_self.5} parent=1 // pred_fallthru
      _
    // Predicated region
    $region22: #{_mha_self.5} parent=1 // pred_check
      _
    $region23: #{_mha_self.5} parent=1 // pred_check_branch
      %82 = sbr.rel (0) target = $region25
    $region24: #{_mha_self.5} parent=1 // pred_region
      %84 = dma.done [#allocation4], 256
    $region25: #{_mha_self.5} parent=1 // pred_fallthru
      _
    %85 = vsyncpa [#allocation4], 1

// kernel: _mha_self.4
$region0: #{_mha_self.4}
  #allocation0 [shape = 'u32[]', space=smem, size = 0x4, offset = 0x4, fixed_abs, tag = 'smem constant byte address 0x4 - core index']
  #allocation1 [shape = 'u32[72,128]{1,0:T(1,128)}', space=vmem, size = 0x9000, scoped, tag = 'internal scratch']
  #allocation2 [shape = 'f32[8,4]{1,0:T(8,128)}', space=vmem, size = 0x1000, scoped, tag = 'scratch operand']
  #allocation3 [shape = 'f32[8,4]{1,0:T(8,128)}', space=vmem, size = 0x1000, scoped, tag = 'scratch operand']
  #allocation4 [shape = 'f32[8,32]{1,0:T(8,128)}', space=vmem, size = 0x1000, scoped, tag = 'scratch operand']
  %s0 = inlined_call_operand.vmem [shape: f32[2,8,32], index: 0, kind: input, shape index: {}]
  %s1 = inlined_call_operand.vmem [shape: f32[2,8,32], index: 1, kind: input, shape index: {}]
  %s2 = inlined_call_operand.vmem [shape: f32[2,8,32], index: 2, kind: input, shape index: {}]
  %s3 = inlined_call_operand.vmem [shape: f32[2,1,8], index: 3, kind: input, shape index: {}]
  %s4 = inlined_call_operand.vmem [shape: f32[2,8,32], index: 4, kind: output, shape index: {}]
  %s5 = sld [smem:[#allocation0]]
  $region57: #{_mha_self.4} parent=0
    _
  %s7 = ssub.s32 1, %s5
  %s8 = scalar_select 0, %s7, %s5
  loop: start=0, step=1, limit=4
  $region2: #{_mha_self.4} parent=0 // loop_pre_header
    _
  $region3: #{_mha_self.4} parent=0 // loop_header
    %s10 = sphi 0, %s14
    %p11 = scmp.ge.s32.totalorder %s10, 4
    %s17 = sphi 0, %s36
    %s18 = sphi 0, %s32
    %s19 = sphi 0, %s28
    %s20 = sphi 0, %s17
    %s21 = sphi 0, %s18
    %s22 = sphi 0, %s19
    %s23 = sphi 0, %s20
    %s24 = sphi 0, %s21
    %s25 = sphi 0, %s22
    %s41 = sphi 0, %s43
    %s44 = sphi 0, %s41
    %s45 = sphi 0, %s44
    %s61 = sphi 0, %s45
    %s69 = sphi 0, %s71
    %s72 = sphi 0, %s69
    %s73 = sphi 0, %s72
    %s89 = sphi 0, %s73
    %s97 = sphi 0, %s99
    %s100 = sphi 0, %s97
    %s101 = sphi 0, %s100
    %s117 = sphi 0, %s101
    %s125 = sphi 0, %s127
    %s128 = sphi 0, %s125
    %s129 = sphi 0, %s128
    %s145 = sphi 0, %s129
    %s153 = sphi 0, %s155
    %s156 = sphi 0, %s153
    %s157 = sphi 0, %s156
    %s173 = sphi 0, %s157
  $region4: #{_mha_self.4} parent=0 // loop_header_branch
    %13 = sbr.rel (%p11) target = $region8
  $region5: #{_mha_self.4} parent=0 // loop_body
    %s15 = ssub.s32 %s10, 1
    %s16 = ssub.s32 %s10, 2
    %s26 = sadd.s32 1, %s19
    %p27 = scmp.ge.s32.totalorder %s26, 1
    %s28 = scalar_select %p27, 0, %s26
    %s29 = sadd.s32 1, %s18
    %s30 = scalar_select %p27, %s29, %s18
    %p31 = scmp.ge.s32.totalorder %s30, 1
    %s32 = scalar_select %p31, 0, %s30
    %s33 = sadd.s32 1, %s17
    %s34 = scalar_select %p31, %s33, %s17
    %p35 = scmp.ge.s32.totalorder %s34, 2
    %s36 = scalar_select %p35, 0, %s34
    %s37 = ssub.s32 %s17, %s36
    %s38 = ssub.s32 %s18, %s32
    %s39 = sor.u32 %s37, %s38
    %p40 = scmp.eq.s32.totalorder %s39, 0
    %s42 = sadd.s32 %s41, 1
    %s43 = scalar_select %p40, %s41, %s42
    %p46 = pneg %p40
    %p47 = scmp.eq.s32.totalorder %s10, 1
    %p48 = por %p46, %p47
    %p49 = scmp.ne.s32.totalorder %s41, %s44
    %p50 = scmp.eq.s32.totalorder %s10, 0
    %p51 = por %p49, %p50
    %p52 = scmp.ne.s32.totalorder %s41, %s44
    %p53 = scmp.eq.s32.totalorder %s15, 1
    %p54 = por %p52, %p53
    %p55 = scmp.ne.s32.totalorder %s44, %s45
    %p56 = scmp.eq.s32.totalorder %s15, 0
    %p57 = por %p55, %p56
    %p58 = scmp.ne.s32.totalorder %s44, %s45
    %p59 = scmp.eq.s32.totalorder %s16, 1
    %p60 = por %p58, %p59
    %p62 = scmp.ne.s32.totalorder %s45, %s61
    %p63 = scmp.eq.s32.totalorder %s16, 0
    %p64 = por %p62, %p63
    %s65 = ssub.s32 %s17, %s36
    %s66 = ssub.s32 %s19, %s28
    %s67 = sor.u32 %s65, %s66
    %p68 = scmp.eq.s32.totalorder %s67, 0
    %s70 = sadd.s32 %s69, 1
    %s71 = scalar_select %p68, %s69, %s70
    %p74 = pneg %p68
    %p75 = scmp.eq.s32.totalorder %s10, 1
    %p76 = por %p74, %p75
    %p77 = scmp.ne.s32.totalorder %s69, %s72
    %p78 = scmp.eq.s32.totalorder %s10, 0
    %p79 = por %p77, %p78
    %p80 = scmp.ne.s32.totalorder %s69, %s72
    %p81 = scmp.eq.s32.totalorder %s15, 1
    %p82 = por %p80, %p81
    %p83 = scmp.ne.s32.totalorder %s72, %s73
    %p84 = scmp.eq.s32.totalorder %s15, 0
    %p85 = por %p83, %p84
    %p86 = scmp.ne.s32.totalorder %s72, %s73
    %p87 = scmp.eq.s32.totalorder %s16, 1
    %p88 = por %p86, %p87
    %p90 = scmp.ne.s32.totalorder %s73, %s89
    %p91 = scmp.eq.s32.totalorder %s16, 0
    %p92 = por %p90, %p91
    %s93 = ssub.s32 %s17, %s36
    %s94 = ssub.s32 %s19, %s28
    %s95 = sor.u32 %s93, %s94
    %p96 = scmp.eq.s32.totalorder %s95, 0
    %s98 = sadd.s32 %s97, 1
    %s99 = scalar_select %p96, %s97, %s98
    %p102 = pneg %p96
    %p103 = scmp.eq.s32.totalorder %s10, 1
    %p104 = por %p102, %p103
    %p105 = scmp.ne.s32.totalorder %s97, %s100
    %p106 = scmp.eq.s32.totalorder %s10, 0
    %p107 = por %p105, %p106
    %p108 = scmp.ne.s32.totalorder %s97, %s100
    %p109 = scmp.eq.s32.totalorder %s15, 1
    %p110 = por %p108, %p109
    %p111 = scmp.ne.s32.totalorder %s100, %s101
    %p112 = scmp.eq.s32.totalorder %s15, 0
    %p113 = por %p111, %p112
    %p114 = scmp.ne.s32.totalorder %s100, %s101
    %p115 = scmp.eq.s32.totalorder %s16, 1
    %p116 = por %p114, %p115
    %p118 = scmp.ne.s32.totalorder %s101, %s117
    %p119 = scmp.eq.s32.totalorder %s16, 0
    %p120 = por %p118, %p119
    %s121 = ssub.s32 %s17, %s36
    %s122 = ssub.s32 %s19, %s28
    %s123 = sor.u32 %s121, %s122
    %p124 = scmp.eq.s32.totalorder %s123, 0
    %s126 = sadd.s32 %s125, 1
    %s127 = scalar_select %p124, %s125, %s126
    %p130 = pneg %p124
    %p131 = scmp.eq.s32.totalorder %s10, 1
    %p132 = por %p130, %p131
    %p133 = scmp.ne.s32.totalorder %s125, %s128
    %p134 = scmp.eq.s32.totalorder %s10, 0
    %p135 = por %p133, %p134
    %p136 = scmp.ne.s32.totalorder %s125, %s128
    %p137 = scmp.eq.s32.totalorder %s15, 1
    %p138 = por %p136, %p137
    %p139 = scmp.ne.s32.totalorder %s128, %s129
    %p140 = scmp.eq.s32.totalorder %s15, 0
    %p141 = por %p139, %p140
    %p142 = scmp.ne.s32.totalorder %s128, %s129
    %p143 = scmp.eq.s32.totalorder %s16, 1
    %p144 = por %p142, %p143
    %p146 = scmp.ne.s32.totalorder %s129, %s145
    %p147 = scmp.eq.s32.totalorder %s16, 0
    %p148 = por %p146, %p147
    %s149 = ssub.s32 %s17, %s36
    %s150 = ssub.s32 %s18, %s32
    %s151 = sor.u32 %s149, %s150
    %p152 = scmp.eq.s32.totalorder %s151, 0
    %s154 = sadd.s32 %s153, 1
    %s155 = scalar_select %p152, %s153, %s154
    %p158 = pneg %p152
    %p159 = scmp.eq.s32.totalorder %s10, 1
    %p160 = por %p158, %p159
    %p161 = scmp.ne.s32.totalorder %s153, %s156
    %p162 = scmp.eq.s32.totalorder %s10, 0
    %p163 = por %p161, %p162
    %p164 = scmp.ne.s32.totalorder %s153, %s156
    %p165 = scmp.eq.s32.totalorder %s15, 1
    %p166 = por %p164, %p165
    %p167 = scmp.ne.s32.totalorder %s156, %s157
    %p168 = scmp.eq.s32.totalorder %s15, 0
    %p169 = por %p167, %p168
    %p170 = scmp.ne.s32.totalorder %s156, %s157
    %p171 = scmp.eq.s32.totalorder %s16, 1
    %p172 = por %p170, %p171
    %p174 = scmp.ne.s32.totalorder %s157, %s173
    %p175 = scmp.eq.s32.totalorder %s16, 0
    %p176 = por %p174, %p175
    %p177 = scmp.le.s32.totalorder 1, %s10
    %p178 = scmp.lt.s32.totalorder %s10, 3
    %p179 = pnand %p177, %p178
    %p180 = pneg %p179
    // Predicated region
    $region9: #{_mha_self.4} parent=5 // pred_check
      _
    $region10: #{_mha_self.4} parent=5 // pred_check_branch
      %182 = sbr.rel (%p179) target = $region12
    $region11: #{_mha_self.4} parent=5 // pred_region
      %s183 = ssub.s32 %s10, 1
    $region12: #{_mha_self.4} parent=5 // pred_fallthru
      _
    %p184 = scmp.lt.s32.totalorder %s10, 2
    // Predicated region
    $region13: #{_mha_self.4} parent=5 // pred_check
      %p185 = pneg %p184
    $region14: #{_mha_self.4} parent=5 // pred_check_branch
      %187 = sbr.rel (%p185) target = $region16
    $region15: #{_mha_self.4} parent=5 // pred_region
      // Predicated region
      $region17: #{_mha_self.4} parent=15 // pred_check
        %p188 = pneg %p51
      $region18: #{_mha_self.4} parent=15 // pred_check_branch
        %190 = sbr.rel (%p188) target = $region20
      $region19: #{_mha_self.4} parent=15 // pred_region
        %p191 = scmp.lt.s32.totalorder %s17, 1
        %s192 = scalar_select %p191, %s17, 1
        %p193 = scmp.lt.s32.totalorder %s18, 0
        %s194 = scalar_select %p193, %s18, 0
        %s195 = sadd.s32 %s194, %s192
        %s196 = smul.addr %s195, 8
        %s197 = scalar_lea.vmem %s0, %s196
      $region20: #{_mha_self.4} parent=15 // pred_fallthru
        _
      // Predicated region
      $region21: #{_mha_self.4} parent=15 // pred_check
        %p198 = pneg %p79
      $region22: #{_mha_self.4} parent=15 // pred_check_branch
        %200 = sbr.rel (%p198) target = $region24
      $region23: #{_mha_self.4} parent=15 // pred_region
        %p201 = scmp.lt.s32.totalorder %s17, 1
        %s202 = scalar_select %p201, %s17, 1
        %p203 = scmp.lt.s32.totalorder %s19, 0
        %s204 = scalar_select %p203, %s19, 0
        %s205 = sadd.s32 %s204, %s202
        %s206 = smul.addr %s205, 8
        %s207 = scalar_lea.vmem %s1, %s206
      $region24: #{_mha_self.4} parent=15 // pred_fallthru
        _
      // Predicated region
      $region25: #{_mha_self.4} parent=15 // pred_check
        %p208 = pneg %p107
      $region26: #{_mha_self.4} parent=15 // pred_check_branch
        %210 = sbr.rel (%p208) target = $region28
      $region27: #{_mha_self.4} parent=15 // pred_region
        %p211 = scmp.lt.s32.totalorder %s17, 1
        %s212 = scalar_select %p211, %s17, 1
        %p213 = scmp.lt.s32.totalorder %s19, 0
        %s214 = scalar_select %p213, %s19, 0
        %s215 = sadd.s32 %s214, %s212
        %s216 = smul.addr %s215, 8
        %s217 = scalar_lea.vmem %s2, %s216
      $region28: #{_mha_self.4} parent=15 // pred_fallthru
        _
      // Predicated region
      $region29: #{_mha_self.4} parent=15 // pred_check
        %p218 = pneg %p135
      $region30: #{_mha_self.4} parent=15 // pred_check_branch
        %220 = sbr.rel (%p218) target = $region32
      $region31: #{_mha_self.4} parent=15 // pred_region
        %p221 = scmp.lt.s32.totalorder %s17, 1
        %s222 = scalar_select %p221, %s17, 1
        %p223 = scmp.lt.s32.totalorder %s19, 0
        %s224 = scalar_select %p223, %s19, 0
        %s225 = sadd.s32 %s224, %s222
        %s226 = scalar_lea.vmem %s3, %s225
      $region32: #{_mha_self.4} parent=15 // pred_fallthru
        _
    $region16: #{_mha_self.4} parent=5 // pred_fallthru
      _
    %p227 = scmp.le.s32.totalorder 1, %s10
    %p228 = scmp.lt.s32.totalorder %s10, 3
    %p229 = pnand %p227, %p228
    %p230 = pneg %p229
    // Predicated region
    $region33: #{_mha_self.4} parent=5 // pred_check
      _
    $region34: #{_mha_self.4} parent=5 // pred_check_branch
      %232 = sbr.rel (%p229) target = $region36
    $region35: #{_mha_self.4} parent=5 // pred_region
      %s233 = ssub.s32 %s10, 1
      %p234 = scmp.lt.s32.totalorder %s20, 1
      %s235 = scalar_select %p234, %s20, 1
      %p236 = scmp.lt.s32.totalorder %s21, 0
      %s237 = scalar_select %p236, %s21, 0
      %s238 = sadd.s32 %s237, %s235
      %s239 = smul.addr %s238, 8
      %s240 = scalar_lea.vmem %s0, %s239
      %p241 = pneg %p57
      %p242 = pneg %p54
      %p243 = scmp.lt.s32.totalorder %s20, 1
      %s244 = scalar_select %p243, %s20, 1
      %p245 = scmp.lt.s32.totalorder %s22, 0
      %s246 = scalar_select %p245, %s22, 0
      %s247 = sadd.s32 %s246, %s244
      %s248 = smul.addr %s247, 8
      %s249 = scalar_lea.vmem %s1, %s248
      %p250 = pneg %p85
      %p251 = pneg %p82
      %p252 = scmp.lt.s32.totalorder %s20, 1
      %s253 = scalar_select %p252, %s20, 1
      %p254 = scmp.lt.s32.totalorder %s22, 0
      %s255 = scalar_select %p254, %s22, 0
      %s256 = sadd.s32 %s255, %s253
      %s257 = smul.addr %s256, 8
      %s258 = scalar_lea.vmem %s2, %s257
      %p259 = pneg %p113
      %p260 = pneg %p110
      %p261 = scmp.lt.s32.totalorder %s20, 1
      %s262 = scalar_select %p261, %s20, 1
      %p263 = scmp.lt.s32.totalorder %s22, 0
      %s264 = scalar_select %p263, %s22, 0
      %s265 = sadd.s32 %s264, %s262
      %s266 = scalar_lea.vmem %s3, %s265
      %p267 = pneg %p141
      %p268 = pneg %p138
      %p269 = pneg %p169
      %p270 = pneg %p166
      %p271 = scmp.lt.s32.totalorder %s20, 1
      %s272 = scalar_select %p271, %s20, 1
      %p273 = scmp.lt.s32.totalorder %s21, 0
      %s274 = scalar_select %p273, %s21, 0
      %s275 = sadd.s32 %s274, %s272
      %s276 = smul.addr %s275, 8
      %s277 = scalar_lea.vmem %s4, %s276
      %p278 = scmp.lt.s32.totalorder %s20, 1
      %s279 = scalar_select %p278, %s20, 1
      %p280 = scmp.lt.s32.totalorder %s21, 0
      %s281 = scalar_select %p280, %s21, 0
      %s282 = sadd.s32 %s281, %s279
      %s283 = smul.addr %s282, 8
      %s284 = scalar_lea.vmem %s0, %s283
      %p285 = scmp.lt.s32.totalorder %s20, 1
      %s286 = scalar_select %p285, %s20, 1
      %p287 = scmp.lt.s32.totalorder %s22, 0
      %s288 = scalar_select %p287, %s22, 0
      %s289 = sadd.s32 %s288, %s286
      %s290 = smul.addr %s289, 8
      %s291 = scalar_lea.vmem %s1, %s290
      %p292 = scmp.lt.s32.totalorder %s20, 1
      %s293 = scalar_select %p292, %s20, 1
      %p294 = scmp.lt.s32.totalorder %s22, 0
      %s295 = scalar_select %p294, %s22, 0
      %s296 = sadd.s32 %s295, %s293
      %s297 = smul.addr %s296, 8
      %s298 = scalar_lea.vmem %s2, %s297
      %p299 = scmp.lt.s32.totalorder %s20, 1
      %s300 = scalar_select %p299, %s20, 1
      %p301 = scmp.lt.s32.totalorder %s22, 0
      %s302 = scalar_select %p301, %s22, 0
      %s303 = sadd.s32 %s302, %s300
      %s304 = scalar_lea.vmem %s3, %s303
      %p305 = scmp.lt.s32.totalorder %s20, 1
      %s306 = scalar_select %p305, %s20, 1
      %p307 = scmp.lt.s32.totalorder %s21, 0
      %s308 = scalar_select %p307, %s21, 0
      %s309 = sadd.s32 %s308, %s306
      %s310 = smul.addr %s309, 8
      %s311 = scalar_lea.vmem %s4, %s310
      %p312 = scmp.eq.s32.totalorder %s22, 0
      // Predicated region
      $region37: #{_mha_self.4} parent=35 // pred_check
        %p313 = pneg %p312
      $region38: #{_mha_self.4} parent=35 // pred_check_branch
        %315 = sbr.rel (%p313) target = $region40
      $region39: #{_mha_self.4} parent=35 // pred_region
        %vm316 = vcmask 31744
        %317 = vst.msk [vmem:[#allocation2] sm:$0xff] %vm316, -inf
        %318 = vst.msk [vmem:[#allocation3] sm:$0xff] %vm316, 0.0
        %vm319 = vcmask 261120
        %320 = vst.msk [vmem:[#allocation4] sm:$0xff] %vm319, 0.0
      $region40: #{_mha_self.4} parent=35 // pred_fallthru
        _
      %v321 = vld [vmem:[%s304] sm:$0x1]
      %vm322 = vcmp.gt.f32.partialorder %v321, 0.5
      %v323 = vld [vmem:[%s284] sm:$0xff]
      %v324 = vld [vmem:[%s291] sm:$0xff]
      %vm325 = vcmask 64512
      %v327 = vsel %vm325, %v323, 0
      %v330 = vsel %vm325, %v324, 0
      %332 = vmatpush.xpose.msra.mxu0 0.0
      %333 = vmatpush.xpose.msra.mxu0 0.0
      %334 = vmatpush.xpose.msra.mxu0 0.0
      %335 = vmatpush.xpose.msra.mxu0 0.0
      %336 = vmatpush.xpose.msra.mxu0 0.0
      %337 = vmatpush.xpose.msra.mxu0 0.0
      %338 = vmatpush.xpose.msra.mxu0 0.0
      %339 = vmatpush.xpose.msra.mxu0 0.0
      %340 = vmatpush.xpose.msra.mxu0 0.0
      %341 = vmatpush.xpose.msra.mxu0 0.0
      %342 = vmatpush.xpose.msra.mxu0 0.0
      %343 = vmatpush.xpose.msra.mxu0 0.0
      %344 = vmatpush.xpose.msra.mxu0 0.0
      %345 = vmatpush.xpose.msra.mxu0 0.0
      %346 = vmatpush.xpose.msra.mxu0 0.0
      %347 = vmatpush.xpose.msra.mxu0 %v330
      %348 = vmatmul.f32.gmra.mxu0 %v327
      %v349 = vpop.f32.mrf.mxu0
      %v350 = vadd.f32 0.0, %v349
      %351 = vdwg.mxu0
      %v352 = vsel %vm322, 1, 0
      %v353 = vperm.slane %v352, 0
      %vm354 = vcmp.eq.s32.totalorder %v353, 1
      %v355 = vsel %vm354, %v350, -1000000.0
      %v356 = vld [vmem:[#allocation2] sm:$0xff]
      %v357 = vsel %vm325, %v355, -inf
      %358 = vmax.xlane.f32.xlu0 %v357
      %v359 = vpop.xlane.xlu0 %358
      %v360 = vmax.f32 %v356, %v359
      %v361 = vsub.f32 %v356, %v360
      %v362 = vmul.f32 %v361, 1.442695
      %v363 = vpow.pop %v362
      %365 = vset.pattern.permute.xlu0 0
      %366 = vperm.xlu0 %365, %v360
      %v367 = vpop.permute.xlu0 %366
      %v369 = vsub.f32 %v355, %v367
      %v370 = vmul.f32 %v369, 1.442695
      %v371 = vpow.pop %v370
      %v372 = vld [vmem:[#allocation3] sm:$0xff]
      %v373 = vmul.f32 %v363, %v372
      %v374 = vsel %vm325, %v371, 0.0
      %375 = vadd.xlane.f32.xlu0 %v374
      %v376 = vpop.xlane.xlu0 %375
      %v377 = vadd.f32 %v373, %v376
      %vm378 = vcmask 7168
      %379 = vst.msk [vmem:[#allocation3] sm:$0xff] %vm378, %v377
      %v380 = vld [vmem:[%s298] sm:$0xff]
      %v382 = vsel %vm325, %v371, 0
      %384 = vmatpush.msra.mxu0 0.0
      %385 = vmatpush.msra.mxu0 0.0
      %386 = vmatpush.msra.mxu0 0.0
      %387 = vmatpush.msra.mxu0 0.0
      %388 = vmatpush.msra.mxu0 0.0
      %389 = vmatpush.msra.mxu0 0.0
      %390 = vmatpush.msra.mxu0 0.0
      %391 = vmatpush.msra.mxu0 0.0
      %392 = vmatpush.msra.mxu0 0.0
      %393 = vmatpush.msra.mxu0 0.0
      %394 = vmatpush.msra.mxu0 0.0
      %395 = vmatpush.msra.mxu0 0.0
      %396 = vmatpush.msra.mxu0 0.0
      %397 = vmatpush.msra.mxu0 0.0
      %398 = vmatpush.msra.mxu0 0.0
      %399 = vmatpush.msra.mxu0 %v380
      %400 = vmatmul.f32.gmra.mxu0 %v382
      %v401 = vpop.f32.mrf.mxu0
      %v402 = vadd.f32 0.0, %v401
      %403 = vdwg.mxu0
      %v404 = vld [vmem:[#allocation4] sm:$0xff]
      %406 = vset.pattern.permute.xlu0 0
      %407 = vperm.xlu0 %406, %v363
      %v408 = vpop.permute.xlu0 %407
      %v410 = vmul.f32 %v408, %v404
      %v411 = vadd.f32 %v410, %v402
      %412 = vst.msk [vmem:[#allocation4] sm:$0xff] %vm325, %v411
      %413 = vst.msk [vmem:[#allocation2] sm:$0xff] %vm378, %v360
      %v414 = vld [vmem:[%s284] sm:$0xff]
      %v415 = vld [vmem:[%s291] sm:$0xff]
      %417 = vrot.lane.b32.xlu0 %v414, 120
      %v418 = vpop.permute.xlu0 %417
      %420 = vrot.lane.b32.xlu0 %v415, 120
      %v421 = vpop.permute.xlu0 %420
      %v422 = vsel %vm325, %v418, 0
      %v424 = vsel %vm325, %v421, 0
      %426 = vmatpush.xpose.msra.mxu0 0.0
      %427 = vmatpush.xpose.msra.mxu0 0.0
      %428 = vmatpush.xpose.msra.mxu0 0.0
      %429 = vmatpush.xpose.msra.mxu0 0.0
      %430 = vmatpush.xpose.msra.mxu0 0.0
      %431 = vmatpush.xpose.msra.mxu0 0.0
      %432 = vmatpush.xpose.msra.mxu0 0.0
      %433 = vmatpush.xpose.msra.mxu0 0.0
      %434 = vmatpush.xpose.msra.mxu0 0.0
      %435 = vmatpush.xpose.msra.mxu0 0.0
      %436 = vmatpush.xpose.msra.mxu0 0.0
      %437 = vmatpush.xpose.msra.mxu0 0.0
      %438 = vmatpush.xpose.msra.mxu0 0.0
      %439 = vmatpush.xpose.msra.mxu0 0.0
      %440 = vmatpush.xpose.msra.mxu0 0.0
      %441 = vmatpush.xpose.msra.mxu0 %v424
      %442 = vmatmul.f32.gmra.mxu0 %v422
      %v443 = vpop.f32.mrf.mxu0
      %v444 = vadd.f32 0.0, %v443
      %445 = vdwg.mxu0
      %v446 = vsel %vm354, %v444, -1000000.0
      %v447 = vld [vmem:[#allocation2] sm:$0xff]
      %v448 = vsel %vm325, %v446, -inf
      %449 = vmax.xlane.f32.xlu0 %v448
      %v450 = vpop.xlane.xlu0 %449
      %v451 = vmax.f32 %v447, %v450
      %v452 = vsub.f32 %v447, %v451
      %v453 = vmul.f32 %v452, 1.442695
      %v454 = vpow.pop %v453
      %456 = vset.pattern.permute.xlu0 1
      %457 = vperm.xlu0 %456, %v451
      %v458 = vpop.permute.xlu0 %457
      %v460 = vsub.f32 %v446, %v458
      %v461 = vmul.f32 %v460, 1.442695
      %v462 = vpow.pop %v461
      %v463 = vld [vmem:[#allocation3] sm:$0xff]
      %v464 = vmul.f32 %v454, %v463
      %v465 = vsel %vm325, %v462, 0.0
      %466 = vadd.xlane.f32.xlu0 %v465
      %v467 = vpop.xlane.xlu0 %466
      %v468 = vadd.f32 %v464, %v467
      %vm469 = vcmask 15368
      %470 = vst.msk [vmem:[#allocation3] sm:$0xff] %vm469, %v468
      %v471 = vld [vmem:[%s298] sm:$0xff]
      %473 = vrot.lane.b32.xlu0 %v471, 120
      %v474 = vpop.permute.xlu0 %473
      %v477 = vsel %vm325, %v462, 0
      %479 = vmatpush.msra.mxu0 0.0
      %480 = vmatpush.msra.mxu0 0.0
      %481 = vmatpush.msra.mxu0 0.0
      %482 = vmatpush.msra.mxu0 0.0
      %483 = vmatpush.msra.mxu0 0.0
      %484 = vmatpush.msra.mxu0 0.0
      %485 = vmatpush.msra.mxu0 0.0
      %486 = vmatpush.msra.mxu0 0.0
      %487 = vmatpush.msra.mxu0 0.0
      %488 = vmatpush.msra.mxu0 0.0
      %489 = vmatpush.msra.mxu0 0.0
      %490 = vmatpush.msra.mxu0 0.0
      %491 = vmatpush.msra.mxu0 0.0
      %492 = vmatpush.msra.mxu0 0.0
      %493 = vmatpush.msra.mxu0 0.0
      %494 = vmatpush.msra.mxu0 %v474
      %495 = vmatmul.f32.gmra.mxu0 %v477
      %v496 = vpop.f32.mrf.mxu0
      %v497 = vadd.f32 0.0, %v496
      %498 = vdwg.mxu0
      %v499 = vld [vmem:[#allocation4] sm:$0xff]
      %501 = vset.pattern.permute.xlu0 1
      %502 = vperm.xlu0 %501, %v454
      %v503 = vpop.permute.xlu0 %502
      %v505 = vmul.f32 %v503, %v499
      %507 = vrot.lane.b32.xlu0 %v497, 8
      %v508 = vpop.permute.xlu0 %507
      %v510 = vadd.f32 %v505, %v508
      %vm511 = vcmask 130112
      %512 = vst.msk [vmem:[#allocation4] sm:$0xff] %vm511, %v510
      %513 = vst.msk [vmem:[#allocation2] sm:$0xff] %vm469, %v451
      %v514 = vld [vmem:[%s284] sm:$0xff]
      %v515 = vld [vmem:[%s291] sm:$0xff]
      %517 = vrot.lane.b32.xlu0 %v514, 112
      %v518 = vpop.permute.xlu0 %517
      %520 = vrot.lane.b32.xlu0 %v515, 112
      %v521 = vpop.permute.xlu0 %520
      %v522 = vsel %vm325, %v518, 0
      %v524 = vsel %vm325, %v521, 0
      %526 = vmatpush.xpose.msra.mxu0 0.0
      %527 = vmatpush.xpose.msra.mxu0 0.0
      %528 = vmatpush.xpose.msra.mxu0 0.0
      %529 = vmatpush.xpose.msra.mxu0 0.0
      %530 = vmatpush.xpose.msra.mxu0 0.0
      %531 = vmatpush.xpose.msra.mxu0 0.0
      %532 = vmatpush.xpose.msra.mxu0 0.0
      %533 = vmatpush.xpose.msra.mxu0 0.0
      %534 = vmatpush.xpose.msra.mxu0 0.0
      %535 = vmatpush.xpose.msra.mxu0 0.0
      %536 = vmatpush.xpose.msra.mxu0 0.0
      %537 = vmatpush.xpose.msra.mxu0 0.0
      %538 = vmatpush.xpose.msra.mxu0 0.0
      %539 = vmatpush.xpose.msra.mxu0 0.0
      %540 = vmatpush.xpose.msra.mxu0 0.0
      %541 = vmatpush.xpose.msra.mxu0 %v524
      %542 = vmatmul.f32.gmra.mxu0 %v522
      %v543 = vpop.f32.mrf.mxu0
      %v544 = vadd.f32 0.0, %v543
      %545 = vdwg.mxu0
      %v546 = vsel %vm354, %v544, -1000000.0
      %v547 = vld [vmem:[#allocation2] sm:$0xff]
      %v548 = vsel %vm325, %v546, -inf
      %549 = vmax.xlane.f32.xlu0 %v548
      %v550 = vpop.xlane.xlu0 %549
      %v551 = vmax.f32 %v547, %v550
      %v552 = vsub.f32 %v547, %v551
      %v553 = vmul.f32 %v552, 1.442695
      %v554 = vpow.pop %v553
      %556 = vset.pattern.permute.xlu0 2
      %557 = vperm.xlu0 %556, %v551
      %v558 = vpop.permute.xlu0 %557
      %v560 = vsub.f32 %v546, %v558
      %v561 = vmul.f32 %v560, 1.442695
      %v562 = vpow.pop %v561
      %v563 = vld [vmem:[#allocation3] sm:$0xff]
      %v564 = vmul.f32 %v554, %v563
      %v565 = vsel %vm325, %v562, 0.0
      %566 = vadd.xlane.f32.xlu0 %v565
      %v567 = vpop.xlane.xlu0 %566
      %v568 = vadd.f32 %v564, %v567
      %vm569 = vcmask 23568
      %570 = vst.msk [vmem:[#allocation3] sm:$0xff] %vm569, %v568
      %v571 = vld [vmem:[%s298] sm:$0xff]
      %573 = vrot.lane.b32.xlu0 %v571, 112
      %v574 = vpop.permute.xlu0 %573
      %v577 = vsel %vm325, %v562, 0
      %579 = vmatpush.msra.mxu0 0.0
      %580 = vmatpush.msra.mxu0 0.0
      %581 = vmatpush.msra.mxu0 0.0
      %582 = vmatpush.msra.mxu0 0.0
      %583 = vmatpush.msra.mxu0 0.0
      %584 = vmatpush.msra.mxu0 0.0
      %585 = vmatpush.msra.mxu0 0.0
      %586 = vmatpush.msra.mxu0 0.0
      %587 = vmatpush.msra.mxu0 0.0
      %588 = vmatpush.msra.mxu0 0.0
      %589 = vmatpush.msra.mxu0 0.0
      %590 = vmatpush.msra.mxu0 0.0
      %591 = vmatpush.msra.mxu0 0.0
      %592 = vmatpush.msra.mxu0 0.0
      %593 = vmatpush.msra.mxu0 0.0
      %594 = vmatpush.msra.mxu0 %v574
      %595 = vmatmul.f32.gmra.mxu0 %v577
      %v596 = vpop.f32.mrf.mxu0
      %v597 = vadd.f32 0.0, %v596
      %598 = vdwg.mxu0
      %v599 = vld [vmem:[#allocation4] sm:$0xff]
      %601 = vset.pattern.permute.xlu0 2
      %602 = vperm.xlu0 %601, %v554
      %v603 = vpop.permute.xlu0 %602
      %v605 = vmul.f32 %v603, %v599
      %607 = vrot.lane.b32.xlu0 %v597, 16
      %v608 = vpop.permute.xlu0 %607
      %v610 = vadd.f32 %v605, %v608
      %vm611 = vcmask 195712
      %612 = vst.msk [vmem:[#allocation4] sm:$0xff] %vm611, %v610
      %613 = vst.msk [vmem:[#allocation2] sm:$0xff] %vm569, %v551
      %v614 = vld [vmem:[%s284] sm:$0xff]
      %v615 = vld [vmem:[%s291] sm:$0xff]
      %617 = vrot.lane.b32.xlu0 %v614, 104
      %v618 = vpop.permute.xlu0 %617
      %620 = vrot.lane.b32.xlu0 %v615, 104
      %v621 = vpop.permute.xlu0 %620
      %v622 = vsel %vm325, %v618, 0
      %v624 = vsel %vm325, %v621, 0
      %626 = vmatpush.xpose.msra.mxu0 0.0
      %627 = vmatpush.xpose.msra.mxu0 0.0
      %628 = vmatpush.xpose.msra.mxu0 0.0
      %629 = vmatpush.xpose.msra.mxu0 0.0
      %630 = vmatpush.xpose.msra.mxu0 0.0
      %631 = vmatpush.xpose.msra.mxu0 0.0
      %632 = vmatpush.xpose.msra.mxu0 0.0
      %633 = vmatpush.xpose.msra.mxu0 0.0
      %634 = vmatpush.xpose.msra.mxu0 0.0
      %635 = vmatpush.xpose.msra.mxu0 0.0
      %636 = vmatpush.xpose.msra.mxu0 0.0
      %637 = vmatpush.xpose.msra.mxu0 0.0
      %638 = vmatpush.xpose.msra.mxu0 0.0
      %639 = vmatpush.xpose.msra.mxu0 0.0
      %640 = vmatpush.xpose.msra.mxu0 0.0
      %641 = vmatpush.xpose.msra.mxu0 %v624
      %642 = vmatmul.f32.gmra.mxu0 %v622
      %v643 = vpop.f32.mrf.mxu0
      %v644 = vadd.f32 0.0, %v643
      %645 = vdwg.mxu0
      %v646 = vsel %vm354, %v644, -1000000.0
      %v647 = vld [vmem:[#allocation2] sm:$0xff]
      %v648 = vsel %vm325, %v646, -inf
      %649 = vmax.xlane.f32.xlu0 %v648
      %v650 = vpop.xlane.xlu0 %649
      %v651 = vmax.f32 %v647, %v650
      %v652 = vsub.f32 %v647, %v651
      %v653 = vmul.f32 %v652, 1.442695
      %v654 = vpow.pop %v653
      %656 = vset.pattern.permute.xlu0 3
      %657 = vperm.xlu0 %656, %v651
      %v658 = vpop.permute.xlu0 %657
      %v660 = vsub.f32 %v646, %v658
      %v661 = vmul.f32 %v660, 1.442695
      %v662 = vpow.pop %v661
      %v663 = vld [vmem:[#allocation3] sm:$0xff]
      %v664 = vmul.f32 %v654, %v663
      %v665 = vsel %vm325, %v662, 0.0
      %666 = vadd.xlane.f32.xlu0 %v665
      %v667 = vpop.xlane.xlu0 %666
      %v668 = vadd.f32 %v664, %v667
      %vm669 = vcmask 31768
      %670 = vst.msk [vmem:[#allocation3] sm:$0xff] %vm669, %v668
      %v671 = vld [vmem:[%s298] sm:$0xff]
      %673 = vrot.lane.b32.xlu0 %v671, 104
      %v674 = vpop.permute.xlu0 %673
      %v677 = vsel %vm325, %v662, 0
      %679 = vmatpush.msra.mxu0 0.0
      %680 = vmatpush.msra.mxu0 0.0
      %681 = vmatpush.msra.mxu0 0.0
      %682 = vmatpush.msra.mxu0 0.0
      %683 = vmatpush.msra.mxu0 0.0
      %684 = vmatpush.msra.mxu0 0.0
      %685 = vmatpush.msra.mxu0 0.0
      %686 = vmatpush.msra.mxu0 0.0
      %687 = vmatpush.msra.mxu0 0.0
      %688 = vmatpush.msra.mxu0 0.0
      %689 = vmatpush.msra.mxu0 0.0
      %690 = vmatpush.msra.mxu0 0.0
      %691 = vmatpush.msra.mxu0 0.0
      %692 = vmatpush.msra.mxu0 0.0
      %693 = vmatpush.msra.mxu0 0.0
      %694 = vmatpush.msra.mxu0 %v674
      %695 = vmatmul.f32.gmra.mxu0 %v677
      %v696 = vpop.f32.mrf.mxu0
      %v697 = vadd.f32 0.0, %v696
      %698 = vdwg.mxu0
      %v699 = vld [vmem:[#allocation4] sm:$0xff]
      %701 = vset.pattern.permute.xlu0 3
      %702 = vperm.xlu0 %701, %v654
      %v703 = vpop.permute.xlu0 %702
      %v705 = vmul.f32 %v703, %v699
      %707 = vrot.lane.b32.xlu0 %v697, 24
      %v708 = vpop.permute.xlu0 %707
      %v710 = vadd.f32 %v705, %v708
      %vm711 = vcmask 261312
      %712 = vst.msk [vmem:[#allocation4] sm:$0xff] %vm711, %v710
      %713 = vst.msk [vmem:[#allocation2] sm:$0xff] %vm669, %v651
      // Predicated region
      $region41: #{_mha_self.4} parent=35 // pred_check
        %p714 = pneg %p312
      $region42: #{_mha_self.4} parent=35 // pred_check_branch
        %716 = sbr.rel (%p714) target = $region44
      $region43: #{_mha_self.4} parent=35 // pred_region
        %v717 = vld [vmem:[#allocation3] sm:$0xff]
        %v718 = vrcp.pop %v717
        %v719 = vld [vmem:[#allocation4] sm:$0xff]
        %721 = vset.pattern.permute.xlu0 0
        %722 = vperm.xlu0 %721, %v718
        %v723 = vpop.permute.xlu0 %722
        %v725 = vmul.f32 %v719, %v723
        %726 = vst.msk [vmem:[%s311] sm:$0xff] %vm325, %v725
        %v727 = vld [vmem:[#allocation3] sm:$0xff]
        %v728 = vrcp.pop %v727
        %v729 = vld [vmem:[#allocation4] sm:$0xff]
        %731 = vset.pattern.permute.xlu0 1
        %732 = vperm.xlu0 %731, %v728
        %v733 = vpop.permute.xlu0 %732
        %v735 = vmul.f32 %v729, %v733
        %736 = vst.msk [vmem:[%s311] sm:$0xff] %vm511, %v735
        %v737 = vld [vmem:[#allocation3] sm:$0xff]
        %v738 = vrcp.pop %v737
        %v739 = vld [vmem:[#allocation4] sm:$0xff]
        %741 = vset.pattern.permute.xlu0 2
        %742 = vperm.xlu0 %741, %v738
        %v743 = vpop.permute.xlu0 %742
        %v745 = vmul.f32 %v739, %v743
        %746 = vst.msk [vmem:[%s311] sm:$0xff] %vm611, %v745
        %v747 = vld [vmem:[#allocation3] sm:$0xff]
        %v748 = vrcp.pop %v747
        %v749 = vld [vmem:[#allocation4] sm:$0xff]
        %751 = vset.pattern.permute.xlu0 3
        %752 = vperm.xlu0 %751, %v748
        %v753 = vpop.permute.xlu0 %752
        %v755 = vmul.f32 %v749, %v753
        %756 = vst.msk [vmem:[%s311] sm:$0xff] %vm711, %v755
      $region44: #{_mha_self.4} parent=35 // pred_fallthru
        _
      %p757 = scmp.lt.s32.totalorder %s20, 1
      %s758 = scalar_select %p757, %s20, 1
      %p759 = scmp.lt.s32.totalorder %s21, 0
      %s760 = scalar_select %p759, %s21, 0
      %s761 = sadd.s32 %s760, %s758
      %s762 = smul.addr %s761, 8
      %s763 = scalar_lea.vmem %s4, %s762
      // Predicated region
      $region45: #{_mha_self.4} parent=35 // pred_check
        %p764 = pneg %p166
      $region46: #{_mha_self.4} parent=35 // pred_check_branch
        %766 = sbr.rel (%p764) target = $region48
      $region47: #{_mha_self.4} parent=35 // pred_region
        _
      $region48: #{_mha_self.4} parent=35 // pred_fallthru
        _
    $region36: #{_mha_self.4} parent=5 // pred_fallthru
      _
    %p767 = scmp.le.s32.totalorder 2, %s10
    // Predicated region
    $region49: #{_mha_self.4} parent=5 // pred_check
      %p768 = pneg %p767
    $region50: #{_mha_self.4} parent=5 // pred_check_branch
      %770 = sbr.rel (%p768) target = $region52
    $region51: #{_mha_self.4} parent=5 // pred_region
      %s771 = ssub.s32 %s10, 2
      // Predicated region
      $region53: #{_mha_self.4} parent=51 // pred_check
        %p772 = pneg %p172
      $region54: #{_mha_self.4} parent=51 // pred_check_branch
        %774 = sbr.rel (%p772) target = $region56
      $region55: #{_mha_self.4} parent=51 // pred_region
        %p775 = scmp.lt.s32.totalorder %s23, 1
        %s776 = scalar_select %p775, %s23, 1
        %p777 = scmp.lt.s32.totalorder %s24, 0
        %s778 = scalar_select %p777, %s24, 0
        %s779 = sadd.s32 %s778, %s776
        %s780 = smul.addr %s779, 8
        %s781 = scalar_lea.vmem %s4, %s780
      $region56: #{_mha_self.4} parent=51 // pred_fallthru
        _
    $region52: #{_mha_self.4} parent=5 // pred_fallthru
      _
  $region6: #{_mha_self.4} parent=0 // loop_footer
    %s14 = sadd.s32 1, %s10
  $region7: #{_mha_self.4} parent=0 // loop_footer_branch
    %9 = sbr.rel target = $region3
  $region8: #{_mha_self.4} parent=0 // loop_exit
    _

</llo_original>
